<compile_context>
chip_gen: v6e
topology: v6e:2x2x1
jax: 0.10.0
libtpu: 0.0.40
codegen_flags: <defaults>
</compile_context>

<pallas_src>
import jax
import jax.numpy as jnp
from jax import lax
from jax.experimental import pallas as pl
from jax.experimental.pallas import tpu as pltpu

_LANE = 128
_SUBLANE = 8


def _round_up(x, m):
    return (x + m - 1) // m * m


def _vmem_capacity_bytes():
    """Physical VMEM of the current TPU generation (conservative fallback)."""
    try:
        return int(pltpu.get_tpu_info().vmem_capacity_bytes)
    except Exception:
        return 64 * 1024 * 1024  # v7x per-TensorCore value: safe everywhere


def rotation_kernel(orig_ref, new_ref, wc_ref, wct_ref, out_ref):
    """One batch tile of the rank-d_das DAS rotation patch.

    orig_ref, new_ref : (tb, D)      VMEM tiles of the residual streams
    wc_ref            : (D, d_pad)   W[:, :d_das] zero-padded to 128 lanes
    wct_ref           : (d_pad, D)   its transpose (precomputed outside)
    out_ref           : (tb, D)      patched residual output tile

    out = orig + ((new - orig) @ W[:, :d_das]) @ W[:, :d_das].T
    """
    delta = new_ref[...] - orig_ref[...]                               # VPU
    z = jnp.dot(delta, wc_ref[...],
                preferred_element_type=jnp.float32,
                precision=lax.Precision.HIGHEST)                       # (tb, d_pad)
    upd = jnp.dot(z, wct_ref[...],
                  preferred_element_type=jnp.float32,
                  precision=lax.Precision.HIGHEST)                     # (tb, D)
    # Re-read orig at writeback instead of keeping the (tb, D) snapshot live
    # across both matmuls: vld slots have slack, the vreg file does not.
    out_ref[...] = (orig_ref[...] + upd).astype(out_ref.dtype)


def apply_rotation(orig_resid, new_resid, weight, *, d_das=1):
    """Pallas implementation of RotationModule.apply_rotation.

    orig_resid, new_resid : [batch, *pos, d_model] float32
    weight                : [d_model, d_model] orthogonal float32
    """
    assert orig_resid.shape == new_resid.shape
    *lead, D = orig_resid.shape
    assert weight.shape == (D, D)
    assert 1 <= d_das <= D

    # Flatten any leading (batch, *pos) dims into one independent row axis.
    orig2 = orig_resid.reshape(-1, D)
    new2 = new_resid.reshape(-1, D)
    B = orig2.shape[0]
    itemsize = jnp.dtype(orig2.dtype).itemsize

    # Low-rank factor: first d_das columns of W, zero-padded to a 128-lane
    # block; transpose precomputed once here (no in-kernel XLU transpose).
    d_pad = _round_up(d_das, _LANE)
    w_col = jnp.zeros((D, d_pad), weight.dtype).at[:, :d_das].set(
        weight[:, :d_das])
    w_col_t = jnp.transpose(w_col)  # (d_pad, D)
    w_bytes = 2 * D * d_pad * itemsize

    # ---- generation-aware VMEM budget (leave headroom for compiler temps) --
    vmem_cap = _vmem_capacity_bytes()
    vmem_budget = min(vmem_cap * 3 // 4, 100 * 1024 * 1024)

    # ---- batch tile from a per-block byte budget ---------------------------
    # Target ~4 MiB per streamed [tb, D] block: amortizes the ~0.35 us/step
    # pipeline overhead (mem-bound streams hit 85%+ of HBM roofline there).
    tb = max(_SUBLANE, (4 * 1024 * 1024) // (D * itemsize))
    tb = min(tb, _round_up(B, _SUBLANE))              # never exceed the batch
    if B > 4 * _SUBLANE:
        # keep >= ~4 grid steps so both v7x TensorCores get work and the DMA
        # pipeline has steps to overlap
        tb = min(tb, _round_up(pl.cdiv(B, 4), _SUBLANE))
    tb = max(_SUBLANE, _round_up(tb, _SUBLANE))

    # Clamp so (3 double-buffered streams + matmul temps + W factors) fit.
    bytes_per_row_2buf = (3 * 2 * D + D + d_pad) * itemsize
    tb_vmem = max(_SUBLANE,
                  ((vmem_budget - w_bytes) // bytes_per_row_2buf)
                  // _SUBLANE * _SUBLANE)
    tb = min(tb, tb_vmem)

    # Triple-buffer the streams on 128 MiB-VMEM parts (v5e/v6e) when it fits.
    n_buf_stream = 2
    if vmem_cap >= 128 * 1024 * 1024:
        footprint_3 = (3 * 3 * tb * D + tb * (D + d_pad)) * itemsize + w_bytes
        if footprint_3 <= vmem_budget:
            n_buf_stream = 3

    footprint = ((3 * n_buf_stream * tb * D + tb * (D + d_pad)) * itemsize
                 + w_bytes)
    vmem_limit = int(min(vmem_budget, max(2 * footprint, 16 * 1024 * 1024)))

    grid = (pl.cdiv(B, tb),)

    # Advisory cost for XLA scheduling around the kernel.
    flops = 2 * 2 * B * D * d_pad
    bytes_accessed = (3 * B * D + 2 * D * d_pad) * itemsize

    def _run(use_buffer_hints):
        def bs(shape, index_map, nbuf):
            if use_buffer_hints and hasattr(pl, "Buffered"):
                return pl.BlockSpec(shape, index_map,
                                    pipeline_mode=pl.Buffered(nbuf))
            return pl.BlockSpec(shape, index_map)

        return pl.pallas_call(
            rotation_kernel,
            out_shape=jax.ShapeDtypeStruct((B, D), orig_resid.dtype),
            grid_spec=pltpu.PrefetchScalarGridSpec(
                num_scalar_prefetch=0,
                grid=grid,
                in_specs=[
                    bs((tb, D), lambda i: (i, 0), n_buf_stream),   # orig tile
                    bs((tb, D), lambda i: (i, 0), n_buf_stream),   # new tile
                    bs((D, d_pad), lambda i: (0, 0), 1),           # W[:, :d_das]
                    bs((d_pad, D), lambda i: (0, 0), 1),           # transpose
                ],
                out_specs=bs((tb, D), lambda i: (i, 0), n_buf_stream),
            ),
            compiler_params=pltpu.CompilerParams(
                dimension_semantics=("parallel",),
                vmem_limit_bytes=vmem_limit,
            ),
            cost_estimate=pl.CostEstimate(
                flops=flops, transcendentals=0,
                bytes_accessed=bytes_accessed),
        )(orig2, new2, w_col, w_col_t)

    try:
        out = _run(True)          # with single-/triple-buffering hints
    except Exception:
        out = _run(False)         # safe fallback: default double buffering

    return out.reshape(*lead, D)


def apply_rotation_ref(orig_resid, new_resid, weight, *, d_das=1):
    """Pure-JAX reference matching the PyTorch module semantics exactly."""
    rot_orig = orig_resid @ weight
    rot_new = new_resid @ weight
    col = jnp.arange(weight.shape[0])
    col = col.reshape((1,) * (orig_resid.ndim - 1) + (-1,))
    rot_patch = jnp.where(col < d_das, rot_new, rot_orig)
    return rot_patch @ weight.T


if __name__ == "__main__":
    # Small shapes consistent with the module: residual-stream vectors
    # [batch, d_model]; d_model aligned to the 128-lane vreg width.
    batch = 8
    d_model = 128

    key = jax.random.PRNGKey(0)
    k_w, k_o, k_n, k_o3, k_n3 = jax.random.split(key, 5)

    # Deterministic orthogonal weight (matches the orthogonal parametrization
    # semantics of the PyTorch module: W is an orthogonal matrix).
    raw = jax.random.normal(k_w, (d_model, d_model), dtype=jnp.float32)
    weight, _ = jnp.linalg.qr(raw)
    weight = weight.astype(jnp.float32)

    # Case 1: [batch, d_model], d_das = 1 (module default).
    orig_resid = jax.random.normal(k_o, (batch, d_model), dtype=jnp.float32)
    new_resid = jax.random.normal(k_n, (batch, d_model), dtype=jnp.float32)
    out = jax.block_until_ready(
        apply_rotation(orig_resid, new_resid, weight, d_das=1))
    ref = apply_rotation_ref(orig_resid, new_resid, weight, d_das=1)
    assert out.shape == (batch, d_model)
    assert jnp.allclose(out, ref, atol=1e-3, rtol=1e-3), "mismatch (d_das=1)"

    # Case 2: [batch, pos, d_model], d_das = 4 — exercises *pos flattening,
    # the ragged (partial last block) path (B = 6), and d_das > 1.
    orig3 = jax.random.normal(k_o3, (2, 3, d_model), dtype=jnp.float32)
    new3 = jax.random.normal(k_n3, (2, 3, d_model), dtype=jnp.float32)
    out3 = jax.block_until_ready(
        apply_rotation(orig3, new3, weight, d_das=4))
    ref3 = apply_rotation_ref(orig3, new3, weight, d_das=4)
    assert out3.shape == (2, 3, d_model)
    assert jnp.allclose(out3, ref3, atol=1e-3, rtol=1e-3), "mismatch (d_das=4)"

    print("KERNEL_OK")
</pallas_src>

<mosaic_0001>
module attributes {stable_mosaic.version = 11 : i64} {
  func.func @rotation_kernel(%arg0: i32, %arg1: memref<8x128xf32, #tpu.memory_space<vmem>>, %arg2: memref<8x128xf32, #tpu.memory_space<vmem>>, %arg3: memref<128x128xf32, #tpu.memory_space<vmem>>, %arg4: memref<128x128xf32, #tpu.memory_space<vmem>>, %arg5: memref<8x128xf32, #tpu.memory_space<vmem>>) attributes {dimension_semantics = [#tpu.dimension_semantics<parallel>], iteration_bounds = array<i64: 1>, scalar_prefetch = 0 : i64, scratch_operands = 0 : i64, tpu.core_type = #tpu.core_type<tc>, window_params = [{pipeline_mode = #tpu.pipeline_mode<double_buffered>, transform_indices = @transform_0, window_bounds = array<i64: 8, 128>}, {pipeline_mode = #tpu.pipeline_mode<double_buffered>, transform_indices = @transform_1, window_bounds = array<i64: 8, 128>}, {pipeline_mode = #tpu.pipeline_mode<synchronous>, transform_indices = @transform_2, window_bounds = array<i64: 128, 128>}, {pipeline_mode = #tpu.pipeline_mode<synchronous>, transform_indices = @transform_3, window_bounds = array<i64: 128, 128>}, {pipeline_mode = #tpu.pipeline_mode<double_buffered>, transform_indices = @transform_4, window_bounds = array<i64: 8, 128>}]} {
    %c0 = arith.constant 0 : index
    %c0_0 = arith.constant 0 : index
    %0 = vector.load %arg2[%c0, %c0_0] : memref<8x128xf32, #tpu.memory_space<vmem>>, vector<8x128xf32>
    %c0_1 = arith.constant 0 : index
    %c0_2 = arith.constant 0 : index
    %1 = vector.load %arg1[%c0_1, %c0_2] : memref<8x128xf32, #tpu.memory_space<vmem>>, vector<8x128xf32>
    %2 = arith.subf %0, %1 : vector<8x128xf32>
    %c0_3 = arith.constant 0 : index
    %c0_4 = arith.constant 0 : index
    %3 = vector.load %arg3[%c0_3, %c0_4] : memref<128x128xf32, #tpu.memory_space<vmem>>, vector<128x128xf32>
    %cst = arith.constant dense<0.000000e+00> : vector<8x128xf32>
    %4 = tpu.matmul %2, %3, %cst {dimension_numbers = #tpu.dot_dimension_numbers<[1], [0], [0], [1], [0, 0, 1, 1], [], []>, precision = #tpu.contract_precision<fp32>} : vector<8x128xf32>, vector<128x128xf32>, vector<8x128xf32> -> vector<8x128xf32>
    %c0_5 = arith.constant 0 : index
    %c0_6 = arith.constant 0 : index
    %5 = vector.load %arg4[%c0_5, %c0_6] : memref<128x128xf32, #tpu.memory_space<vmem>>, vector<128x128xf32>
    %cst_7 = arith.constant dense<0.000000e+00> : vector<8x128xf32>
    %6 = tpu.matmul %4, %5, %cst_7 {dimension_numbers = #tpu.dot_dimension_numbers<[1], [0], [0], [1], [0, 0, 1, 1], [], []>, precision = #tpu.contract_precision<fp32>} : vector<8x128xf32>, vector<128x128xf32>, vector<8x128xf32> -> vector<8x128xf32>
    %c0_8 = arith.constant 0 : index
    %c0_9 = arith.constant 0 : index
    %7 = vector.load %arg1[%c0_8, %c0_9] : memref<8x128xf32, #tpu.memory_space<vmem>>, vector<8x128xf32>
    %8 = arith.addf %7, %6 : vector<8x128xf32>
    %c0_10 = arith.constant 0 : index
    %c0_11 = arith.constant 0 : index
    %9 = vector.load %arg5[%c0_10, %c0_11] : memref<8x128xf32, #tpu.memory_space<vmem>>, vector<8x128xf32>
    tpu.vector_store %arg5[%c0_10, %c0_11], %8 {strides = array<i32>} : memref<8x128xf32, #tpu.memory_space<vmem>>, vector<8x128xf32>,
    return
  }
  func.func @transform_0(%arg0: i32) -> (i32, i32) {
    %c0_i32 = arith.constant 0 : i32
    %c0_i32_0 = arith.constant 0 : i32
    return %arg0, %c0_i32 : i32, i32
  }
  func.func @transform_1(%arg0: i32) -> (i32, i32) {
    %c0_i32 = arith.constant 0 : i32
    %c0_i32_0 = arith.constant 0 : i32
    return %arg0, %c0_i32 : i32, i32
  }
  func.func @transform_2(%arg0: i32) -> (i32, i32) {
    %c0_i32 = arith.constant 0 : i32
    %c0_i32_0 = arith.constant 0 : i32
    %c0_i32_1 = arith.constant 0 : i32
    return %c0_i32, %c0_i32_0 : i32, i32
  }
  func.func @transform_3(%arg0: i32) -> (i32, i32) {
    %c0_i32 = arith.constant 0 : i32
    %c0_i32_0 = arith.constant 0 : i32
    %c0_i32_1 = arith.constant 0 : i32
    return %c0_i32, %c0_i32_0 : i32, i32
  }
  func.func @transform_4(%arg0: i32) -> (i32, i32) {
    %c0_i32 = arith.constant 0 : i32
    %c0_i32_0 = arith.constant 0 : i32
    return %arg0, %c0_i32 : i32, i32
  }
}

module attributes {stable_mosaic.version = 11 : i64} {
  func.func @rotation_kernel(%arg0: i32, %arg1: memref<8x128xf32, #tpu.memory_space<vmem>>, %arg2: memref<8x128xf32, #tpu.memory_space<vmem>>, %arg3: memref<128x128xf32, #tpu.memory_space<vmem>>, %arg4: memref<128x128xf32, #tpu.memory_space<vmem>>, %arg5: memref<8x128xf32, #tpu.memory_space<vmem>>) attributes {dimension_semantics = [#tpu.dimension_semantics<parallel>], iteration_bounds = array<i64: 1>, scalar_prefetch = 0 : i64, scratch_operands = 0 : i64, tpu.core_type = #tpu.core_type<tc>, window_params = [{transform_indices = @transform_0, window_bounds = array<i64: 8, 128>}, {transform_indices = @transform_1, window_bounds = array<i64: 8, 128>}, {pipeline_mode = #tpu.pipeline_mode<synchronous>, transform_indices = @transform_2, window_bounds = array<i64: 128, 128>}, {pipeline_mode = #tpu.pipeline_mode<synchronous>, transform_indices = @transform_3, window_bounds = array<i64: 128, 128>}, {transform_indices = @transform_4, window_bounds = array<i64: 8, 128>}]} {
    %c0 = arith.constant 0 : index
    %c0_0 = arith.constant 0 : index
    %0 = vector.load %arg2[%c0, %c0_0] : memref<8x128xf32, #tpu.memory_space<vmem>>, vector<8x128xf32>
    %c0_1 = arith.constant 0 : index
    %c0_2 = arith.constant 0 : index
    %1 = vector.load %arg1[%c0_1, %c0_2] : memref<8x128xf32, #tpu.memory_space<vmem>>, vector<8x128xf32>
    %2 = arith.subf %0, %1 : vector<8x128xf32>
    %c0_3 = arith.constant 0 : index
    %c0_4 = arith.constant 0 : index
    %3 = vector.load %arg3[%c0_3, %c0_4] : memref<128x128xf32, #tpu.memory_space<vmem>>, vector<128x128xf32>
    %cst = arith.constant dense<0.000000e+00> : vector<8x128xf32>
    %4 = tpu.matmul %2, %3, %cst {dimension_numbers = #tpu.dot_dimension_numbers<[1], [0], [0], [1], [0, 0, 1, 1], [], []>, precision = #tpu.contract_precision<fp32>} : vector<8x128xf32>, vector<128x128xf32>, vector<8x128xf32> -> vector<8x128xf32>
    %c0_5 = arith.constant 0 : index
    %c0_6 = arith.constant 0 : index
    %5 = vector.load %arg4[%c0_5, %c0_6] : memref<128x128xf32, #tpu.memory_space<vmem>>, vector<128x128xf32>
    %cst_7 = arith.constant dense<0.000000e+00> : vector<8x128xf32>
    %6 = tpu.matmul %4, %5, %cst_7 {dimension_numbers = #tpu.dot_dimension_numbers<[1], [0], [0], [1], [0, 0, 1, 1], [], []>, precision = #tpu.contract_precision<fp32>} : vector<8x128xf32>, vector<128x128xf32>, vector<8x128xf32> -> vector<8x128xf32>
    %c0_8 = arith.constant 0 : index
    %c0_9 = arith.constant 0 : index
    %7 = vector.load %arg1[%c0_8, %c0_9] : memref<8x128xf32, #tpu.memory_space<vmem>>, vector<8x128xf32>
    %8 = arith.addf %7, %6 : vector<8x128xf32>
    %c0_10 = arith.constant 0 : index
    %c0_11 = arith.constant 0 : index
    %9 = vector.load %arg5[%c0_10, %c0_11] : memref<8x128xf32, #tpu.memory_space<vmem>>, vector<8x128xf32>
    tpu.vector_store %arg5[%c0_10, %c0_11], %8 {strides = array<i32>} : memref<8x128xf32, #tpu.memory_space<vmem>>, vector<8x128xf32>,
    return
  }
  func.func @transform_0(%arg0: i32) -> (i32, i32) {
    %c0_i32 = arith.constant 0 : i32
    %c0_i32_0 = arith.constant 0 : i32
    return %arg0, %c0_i32 : i32, i32
  }
  func.func @transform_1(%arg0: i32) -> (i32, i32) {
    %c0_i32 = arith.constant 0 : i32
    %c0_i32_0 = arith.constant 0 : i32
    return %arg0, %c0_i32 : i32, i32
  }
  func.func @transform_2(%arg0: i32) -> (i32, i32) {
    %c0_i32 = arith.constant 0 : i32
    %c0_i32_0 = arith.constant 0 : i32
    %c0_i32_1 = arith.constant 0 : i32
    return %c0_i32, %c0_i32_0 : i32, i32
  }
  func.func @transform_3(%arg0: i32) -> (i32, i32) {
    %c0_i32 = arith.constant 0 : i32
    %c0_i32_0 = arith.constant 0 : i32
    %c0_i32_1 = arith.constant 0 : i32
    return %c0_i32, %c0_i32_0 : i32, i32
  }
  func.func @transform_4(%arg0: i32) -> (i32, i32) {
    %c0_i32 = arith.constant 0 : i32
    %c0_i32_0 = arith.constant 0 : i32
    return %arg0, %c0_i32 : i32, i32
  }
}

</mosaic_0001>

<llo_original>
// kernel: tpu_custom_call.1
$region0: #{tpu_custom_call.1}
  #allocation0 [shape = 'u32[]', space=smem, size = 0x4, offset = 0x4, fixed_abs, tag = 'smem constant byte address 0x4 - core index']
  #allocation1 [shape = 'u32[144,128]{1,0:T(1,128)}', space=vmem, size = 0x12000, scoped, tag = 'internal scratch']
  %s0 = inlined_call_operand.hbm [shape: f32[8,128], index: 0, kind: input, shape index: {}]
  %s1 = inlined_call_operand.hbm [shape: f32[8,128], index: 1, kind: input, shape index: {}]
  %s2 = inlined_call_operand.hbm [shape: f32[128,128], index: 2, kind: input, shape index: {}]
  %s3 = inlined_call_operand.hbm [shape: f32[128,128], index: 3, kind: input, shape index: {}]
  %s4 = inlined_call_operand.hbm [shape: f32[8,128], index: 4, kind: output, shape index: {}]
  %s5 = sld [smem:[#allocation0]]
  $region42: #{tpu_custom_call.1} parent=0
    _
  %s7 = ssub.s32 1, %s5
  %s8 = scalar_select 0, %s7, %s5
  $region1: #{tpu_custom_call.1} parent=0
    #allocation2 [shape = 'u8[4096]{0}', space=vmem, size = 0x1000, scoped, tag = 'input window, operand 0, single buffered']
    #allocation3 [shape = 's32[1]{0}', space=sflag, size = 0x4, scoped, tag = 'scoped memory for tpu_custom_call.1']
    #allocation4 [shape = 's32[1]{0}', space=sflag, size = 0x4, scoped, tag = 'scoped memory for tpu_custom_call.1']
    #allocation5 [shape = 'u8[4096]{0}', space=vmem, size = 0x1000, scoped, tag = 'input window, operand 1, single buffered']
    #allocation6 [shape = 's32[1]{0}', space=sflag, size = 0x4, scoped, tag = 'scoped memory for tpu_custom_call.1']
    #allocation7 [shape = 'u8[65536]{0}', space=vmem, size = 0x10000, scoped, tag = 'input window, operand 2, single buffered']
    #allocation8 [shape = 'u8[65536]{0}', space=vmem, size = 0x10000, scoped, tag = 'input window, operand 3, single buffered']
    #allocation9 [shape = 's32[1]{0}', space=sflag, size = 0x4, scoped, tag = 'scoped memory for tpu_custom_call.1']
    #allocation10 [shape = 'u8[4096]{0}', space=vmem, size = 0x1000, scoped, tag = 'output window, operand 0, single buffered']
    %9 = vsyncpa [#allocation3], 0
    %10 = vsyncpa [#allocation6], 0
    %11 = vsyncpa [#allocation9], 0
    %12 = vsyncpa [#allocation4], 0
    // Predicated region
    $region2: #{tpu_custom_call.1} parent=1 // pred_check
      _
    $region3: #{tpu_custom_call.1} parent=1 // pred_check_branch
      %14 = sbr.rel (0) target = $region5
    $region4: #{tpu_custom_call.1} parent=1 // pred_region
      %s16 = ssub.s32 128, 128
      %17 = vsyncadd [#allocation3], %s16
      %s19 = sshll.u32 [#allocation2], 4
      %s20 = int_to_ptr.vmem [resolvable:$true] %s19
      %22 = dma.hbm_to_vmem [thread:$0]  %s0, 128, %s20, [#allocation3]
    $region5: #{tpu_custom_call.1} parent=1 // pred_fallthru
      _
    // Predicated region
    $region6: #{tpu_custom_call.1} parent=1 // pred_check
      _
    $region7: #{tpu_custom_call.1} parent=1 // pred_check_branch
      %24 = sbr.rel (0) target = $region9
    $region8: #{tpu_custom_call.1} parent=1 // pred_region
      %s26 = ssub.s32 128, 128
      %27 = vsyncadd [#allocation6], %s26
      %s29 = sshll.u32 [#allocation5], 4
      %s30 = int_to_ptr.vmem [resolvable:$true] %s29
      %32 = dma.hbm_to_vmem [thread:$0]  %s1, 128, %s30, [#allocation6]
    $region9: #{tpu_custom_call.1} parent=1 // pred_fallthru
      _
    // Predicated region
    $region10: #{tpu_custom_call.1} parent=1 // pred_check
      _
    $region11: #{tpu_custom_call.1} parent=1 // pred_check_branch
      %34 = sbr.rel (0) target = $region13
    $region12: #{tpu_custom_call.1} parent=1 // pred_region
      %s36 = ssub.s32 2048, 2048
      %37 = vsyncadd [#allocation6], %s36
      %s38 = sshll.u32 [#allocation7], 4
      %s39 = int_to_ptr.vmem [resolvable:$true] %s38
      %44 = dma.hbm_to_vmem [thread:$0]  %s2, 2048, %s39, [#allocation6], 128, 128, 8
    $region13: #{tpu_custom_call.1} parent=1 // pred_fallthru
      _
    // Predicated region
    $region14: #{tpu_custom_call.1} parent=1 // pred_check
      _
    $region15: #{tpu_custom_call.1} parent=1 // pred_check_branch
      %46 = sbr.rel (0) target = $region17
    $region16: #{tpu_custom_call.1} parent=1 // pred_region
      %s48 = ssub.s32 2048, 2048
      %49 = vsyncadd [#allocation9], %s48
      %s50 = sshll.u32 [#allocation8], 4
      %s51 = int_to_ptr.vmem [resolvable:$true] %s50
      %56 = dma.hbm_to_vmem [thread:$0]  %s3, 2048, %s51, [#allocation9], 128, 128, 8
    $region17: #{tpu_custom_call.1} parent=1 // pred_fallthru
      _
    // Predicated region
    $region18: #{tpu_custom_call.1} parent=1 // pred_check
      _
    $region19: #{tpu_custom_call.1} parent=1 // pred_check_branch
      %58 = sbr.rel (0) target = $region21
    $region20: #{tpu_custom_call.1} parent=1 // pred_region
      %59 = dma.done [#allocation3], 128
    $region21: #{tpu_custom_call.1} parent=1 // pred_fallthru
      _
    // Predicated region
    $region22: #{tpu_custom_call.1} parent=1 // pred_check
      _
    $region23: #{tpu_custom_call.1} parent=1 // pred_check_branch
      %61 = sbr.rel (0) target = $region25
    $region24: #{tpu_custom_call.1} parent=1 // pred_region
      %62 = dma.done [#allocation6], 128
    $region25: #{tpu_custom_call.1} parent=1 // pred_fallthru
      _
    // Predicated region
    $region26: #{tpu_custom_call.1} parent=1 // pred_check
      _
    $region27: #{tpu_custom_call.1} parent=1 // pred_check_branch
      %64 = sbr.rel (0) target = $region29
    $region28: #{tpu_custom_call.1} parent=1 // pred_region
      %65 = dma.done [#allocation6], 2048
    $region29: #{tpu_custom_call.1} parent=1 // pred_fallthru
      _
    // Predicated region
    $region30: #{tpu_custom_call.1} parent=1 // pred_check
      _
    $region31: #{tpu_custom_call.1} parent=1 // pred_check_branch
      %67 = sbr.rel (0) target = $region33
    $region32: #{tpu_custom_call.1} parent=1 // pred_region
      %68 = dma.done [#allocation9], 2048
    $region33: #{tpu_custom_call.1} parent=1 // pred_fallthru
      _
    %v69 = vld [vmem:[#allocation5] sm:$0xff]
    %v70 = vld [vmem:[#allocation2] sm:$0xff]
    %v71 = vsub.f32 %v69, %v70
    %v72 = vld [vmem:[#allocation7] sm:$0xff]
    %v73 = vld [vmem:[#allocation7 + $0x8] sm:$0xff]
    %v74 = vld [vmem:[#allocation7 + $0x10] sm:$0xff]
    %v75 = vld [vmem:[#allocation7 + $0x18] sm:$0xff]
    %v76 = vld [vmem:[#allocation7 + $0x20] sm:$0xff]
    %v77 = vld [vmem:[#allocation7 + $0x28] sm:$0xff]
    %v78 = vld [vmem:[#allocation7 + $0x30] sm:$0xff]
    %v79 = vld [vmem:[#allocation7 + $0x38] sm:$0xff]
    %v80 = vld [vmem:[#allocation7 + $0x40] sm:$0xff]
    %v81 = vld [vmem:[#allocation7 + $0x48] sm:$0xff]
    %v82 = vld [vmem:[#allocation7 + $0x50] sm:$0xff]
    %v83 = vld [vmem:[#allocation7 + $0x58] sm:$0xff]
    %v84 = vld [vmem:[#allocation7 + $0x60] sm:$0xff]
    %v85 = vld [vmem:[#allocation7 + $0x68] sm:$0xff]
    %v86 = vld [vmem:[#allocation7 + $0x70] sm:$0xff]
    %v87 = vld [vmem:[#allocation7 + $0x78] sm:$0xff]
    %88 = vmatprep.subr.mxu0 0.0
    %v89 = vand.u32 %v87, 4294901760
    %90 = vmatpush1.msra.mxu0 %v89
    %91 = vmatprep.subr.mxu0 0.0
    %v92 = vand.u32 %v86, 4294901760
    %93 = vmatpush1.msra.mxu0 %v92
    %94 = vmatprep.subr.mxu0 0.0
    %v95 = vand.u32 %v85, 4294901760
    %96 = vmatpush1.msra.mxu0 %v95
    %97 = vmatprep.subr.mxu0 0.0
    %v98 = vand.u32 %v84, 4294901760
    %99 = vmatpush1.msra.mxu0 %v98
    %100 = vmatprep.subr.mxu0 0.0
    %v101 = vand.u32 %v83, 4294901760
    %102 = vmatpush1.msra.mxu0 %v101
    %103 = vmatprep.subr.mxu0 0.0
    %v104 = vand.u32 %v82, 4294901760
    %105 = vmatpush1.msra.mxu0 %v104
    %106 = vmatprep.subr.mxu0 0.0
    %v107 = vand.u32 %v81, 4294901760
    %108 = vmatpush1.msra.mxu0 %v107
    %109 = vmatprep.subr.mxu0 0.0
    %v110 = vand.u32 %v80, 4294901760
    %111 = vmatpush1.msra.mxu0 %v110
    %112 = vmatprep.subr.mxu0 0.0
    %v113 = vand.u32 %v79, 4294901760
    %114 = vmatpush1.msra.mxu0 %v113
    %115 = vmatprep.subr.mxu0 0.0
    %v116 = vand.u32 %v78, 4294901760
    %117 = vmatpush1.msra.mxu0 %v116
    %118 = vmatprep.subr.mxu0 0.0
    %v119 = vand.u32 %v77, 4294901760
    %120 = vmatpush1.msra.mxu0 %v119
    %121 = vmatprep.subr.mxu0 0.0
    %v122 = vand.u32 %v76, 4294901760
    %123 = vmatpush1.msra.mxu0 %v122
    %124 = vmatprep.subr.mxu0 0.0
    %v125 = vand.u32 %v75, 4294901760
    %126 = vmatpush1.msra.mxu0 %v125
    %127 = vmatprep.subr.mxu0 0.0
    %v128 = vand.u32 %v74, 4294901760
    %129 = vmatpush1.msra.mxu0 %v128
    %130 = vmatprep.subr.mxu0 0.0
    %v131 = vand.u32 %v73, 4294901760
    %132 = vmatpush1.msra.mxu0 %v131
    %133 = vmatprep.subr.mxu0 0.0
    %v134 = vand.u32 %v72, 4294901760
    %135 = vmatpush1.msra.mxu0 %v134
    %136 = vmatprep.subr.mxu0 0.0
    %137 = vmatpush2.msra.mxu0 0.0
    %138 = vmatprep.subr.mxu0 0.0
    %139 = vmatpush2.msra.mxu0 0.0
    %140 = vmatprep.subr.mxu0 0.0
    %141 = vmatpush2.msra.mxu0 0.0
    %142 = vmatprep.subr.mxu0 0.0
    %143 = vmatpush2.msra.mxu0 0.0
    %144 = vmatprep.subr.mxu0 0.0
    %145 = vmatpush2.msra.mxu0 0.0
    %146 = vmatprep.subr.mxu0 0.0
    %147 = vmatpush2.msra.mxu0 0.0
    %148 = vmatprep.subr.mxu0 0.0
    %149 = vmatpush2.msra.mxu0 0.0
    %150 = vmatprep.subr.mxu0 0.0
    %151 = vmatpush2.msra.mxu0 0.0
    %152 = vmatprep.subr.mxu0 0.0
    %153 = vmatpush2.msra.mxu0 0.0
    %154 = vmatprep.subr.mxu0 0.0
    %155 = vmatpush2.msra.mxu0 0.0
    %156 = vmatprep.subr.mxu0 0.0
    %157 = vmatpush2.msra.mxu0 0.0
    %158 = vmatprep.subr.mxu0 0.0
    %159 = vmatpush2.msra.mxu0 0.0
    %160 = vmatprep.subr.mxu0 0.0
    %161 = vmatpush2.msra.mxu0 0.0
    %162 = vmatprep.subr.mxu0 0.0
    %163 = vmatpush2.msra.mxu0 0.0
    %164 = vmatprep.subr.mxu0 0.0
    %165 = vmatpush2.msra.mxu0 0.0
    %166 = vmatprep.subr.mxu0 0.0
    %167 = vmatpush2.msra.mxu0 0.0
    %168 = vmatprep.mubr.f32.mxu0 0.0
    %v169 = vand.u32 %v71, 4294901760
    %v170 = vsub.f32 %v71, %v169
    %v171 = vand.u32 %v170, 4294901760
    %v172 = vsub.f32 %v170, %v171
    %v173 = vand.u32 %v172, 4294901760
    %174 = vmatmul.mubr.f32.gmra.mxu0 %v173
    %v175 = vpop.f32.mrf.mxu0
    %v176 = vadd.f32 0.0, %v175
    %v177 = vpop.f32.mrf.mxu0
    %178 = vdwg.mxu0
    %179 = vmatprep.subr.mxu0 0.0
    %v180 = vand.u32 %v87, 4294901760
    %v181 = vsub.f32 %v87, %v180
    %v182 = vand.u32 %v181, 4294901760
    %v183 = vsub.f32 %v181, %v182
    %v184 = vand.u32 %v183, 4294901760
    %185 = vmatpush1.msra.mxu0 %v184
    %186 = vmatprep.subr.mxu0 0.0
    %v187 = vand.u32 %v86, 4294901760
    %v188 = vsub.f32 %v86, %v187
    %v189 = vand.u32 %v188, 4294901760
    %v190 = vsub.f32 %v188, %v189
    %v191 = vand.u32 %v190, 4294901760
    %192 = vmatpush1.msra.mxu0 %v191
    %193 = vmatprep.subr.mxu0 0.0
    %v194 = vand.u32 %v85, 4294901760
    %v195 = vsub.f32 %v85, %v194
    %v196 = vand.u32 %v195, 4294901760
    %v197 = vsub.f32 %v195, %v196
    %v198 = vand.u32 %v197, 4294901760
    %199 = vmatpush1.msra.mxu0 %v198
    %200 = vmatprep.subr.mxu0 0.0
    %v201 = vand.u32 %v84, 4294901760
    %v202 = vsub.f32 %v84, %v201
    %v203 = vand.u32 %v202, 4294901760
    %v204 = vsub.f32 %v202, %v203
    %v205 = vand.u32 %v204, 4294901760
    %206 = vmatpush1.msra.mxu0 %v205
    %207 = vmatprep.subr.mxu0 0.0
    %v208 = vand.u32 %v83, 4294901760
    %v209 = vsub.f32 %v83, %v208
    %v210 = vand.u32 %v209, 4294901760
    %v211 = vsub.f32 %v209, %v210
    %v212 = vand.u32 %v211, 4294901760
    %213 = vmatpush1.msra.mxu0 %v212
    %214 = vmatprep.subr.mxu0 0.0
    %v215 = vand.u32 %v82, 4294901760
    %v216 = vsub.f32 %v82, %v215
    %v217 = vand.u32 %v216, 4294901760
    %v218 = vsub.f32 %v216, %v217
    %v219 = vand.u32 %v218, 4294901760
    %220 = vmatpush1.msra.mxu0 %v219
    %221 = vmatprep.subr.mxu0 0.0
    %v222 = vand.u32 %v81, 4294901760
    %v223 = vsub.f32 %v81, %v222
    %v224 = vand.u32 %v223, 4294901760
    %v225 = vsub.f32 %v223, %v224
    %v226 = vand.u32 %v225, 4294901760
    %227 = vmatpush1.msra.mxu0 %v226
    %228 = vmatprep.subr.mxu0 0.0
    %v229 = vand.u32 %v80, 4294901760
    %v230 = vsub.f32 %v80, %v229
    %v231 = vand.u32 %v230, 4294901760
    %v232 = vsub.f32 %v230, %v231
    %v233 = vand.u32 %v232, 4294901760
    %234 = vmatpush1.msra.mxu0 %v233
    %235 = vmatprep.subr.mxu0 0.0
    %v236 = vand.u32 %v79, 4294901760
    %v237 = vsub.f32 %v79, %v236
    %v238 = vand.u32 %v237, 4294901760
    %v239 = vsub.f32 %v237, %v238
    %v240 = vand.u32 %v239, 4294901760
    %241 = vmatpush1.msra.mxu0 %v240
    %242 = vmatprep.subr.mxu0 0.0
    %v243 = vand.u32 %v78, 4294901760
    %v244 = vsub.f32 %v78, %v243
    %v245 = vand.u32 %v244, 4294901760
    %v246 = vsub.f32 %v244, %v245
    %v247 = vand.u32 %v246, 4294901760
    %248 = vmatpush1.msra.mxu0 %v247
    %249 = vmatprep.subr.mxu0 0.0
    %v250 = vand.u32 %v77, 4294901760
    %v251 = vsub.f32 %v77, %v250
    %v252 = vand.u32 %v251, 4294901760
    %v253 = vsub.f32 %v251, %v252
    %v254 = vand.u32 %v253, 4294901760
    %255 = vmatpush1.msra.mxu0 %v254
    %256 = vmatprep.subr.mxu0 0.0
    %v257 = vand.u32 %v76, 4294901760
    %v258 = vsub.f32 %v76, %v257
    %v259 = vand.u32 %v258, 4294901760
    %v260 = vsub.f32 %v258, %v259
    %v261 = vand.u32 %v260, 4294901760
    %262 = vmatpush1.msra.mxu0 %v261
    %263 = vmatprep.subr.mxu0 0.0
    %v264 = vand.u32 %v75, 4294901760
    %v265 = vsub.f32 %v75, %v264
    %v266 = vand.u32 %v265, 4294901760
    %v267 = vsub.f32 %v265, %v266
    %v268 = vand.u32 %v267, 4294901760
    %269 = vmatpush1.msra.mxu0 %v268
    %270 = vmatprep.subr.mxu0 0.0
    %v271 = vand.u32 %v74, 4294901760
    %v272 = vsub.f32 %v74, %v271
    %v273 = vand.u32 %v272, 4294901760
    %v274 = vsub.f32 %v272, %v273
    %v275 = vand.u32 %v274, 4294901760
    %276 = vmatpush1.msra.mxu0 %v275
    %277 = vmatprep.subr.mxu0 0.0
    %v278 = vand.u32 %v73, 4294901760
    %v279 = vsub.f32 %v73, %v278
    %v280 = vand.u32 %v279, 4294901760
    %v281 = vsub.f32 %v279, %v280
    %v282 = vand.u32 %v281, 4294901760
    %283 = vmatpush1.msra.mxu0 %v282
    %284 = vmatprep.subr.mxu0 0.0
    %v285 = vand.u32 %v72, 4294901760
    %v286 = vsub.f32 %v72, %v285
    %v287 = vand.u32 %v286, 4294901760
    %v288 = vsub.f32 %v286, %v287
    %v289 = vand.u32 %v288, 4294901760
    %290 = vmatpush1.msra.mxu0 %v289
    %291 = vmatprep.subr.mxu0 0.0
    %292 = vmatpush2.msra.mxu0 0.0
    %293 = vmatprep.subr.mxu0 0.0
    %294 = vmatpush2.msra.mxu0 0.0
    %295 = vmatprep.subr.mxu0 0.0
    %296 = vmatpush2.msra.mxu0 0.0
    %297 = vmatprep.subr.mxu0 0.0
    %298 = vmatpush2.msra.mxu0 0.0
    %299 = vmatprep.subr.mxu0 0.0
    %300 = vmatpush2.msra.mxu0 0.0
    %301 = vmatprep.subr.mxu0 0.0
    %302 = vmatpush2.msra.mxu0 0.0
    %303 = vmatprep.subr.mxu0 0.0
    %304 = vmatpush2.msra.mxu0 0.0
    %305 = vmatprep.subr.mxu0 0.0
    %306 = vmatpush2.msra.mxu0 0.0
    %307 = vmatprep.subr.mxu0 0.0
    %308 = vmatpush2.msra.mxu0 0.0
    %309 = vmatprep.subr.mxu0 0.0
    %310 = vmatpush2.msra.mxu0 0.0
    %311 = vmatprep.subr.mxu0 0.0
    %312 = vmatpush2.msra.mxu0 0.0
    %313 = vmatprep.subr.mxu0 0.0
    %314 = vmatpush2.msra.mxu0 0.0
    %315 = vmatprep.subr.mxu0 0.0
    %316 = vmatpush2.msra.mxu0 0.0
    %317 = vmatprep.subr.mxu0 0.0
    %318 = vmatpush2.msra.mxu0 0.0
    %319 = vmatprep.subr.mxu0 0.0
    %320 = vmatpush2.msra.mxu0 0.0
    %321 = vmatprep.subr.mxu0 0.0
    %322 = vmatpush2.msra.mxu0 0.0
    %323 = vmatprep.mubr.f32.mxu0 0.0
    %v324 = vand.u32 %v71, 4294901760
    %325 = vmatmul.mubr.f32.gmra.mxu0 %v324
    %v326 = vpop.f32.mrf.mxu0
    %v327 = vadd.f32 %v176, %v326
    %v328 = vpop.f32.mrf.mxu0
    %329 = vdwg.mxu0
    %330 = vmatprep.subr.mxu0 0.0
    %v331 = vand.u32 %v87, 4294901760
    %v332 = vsub.f32 %v87, %v331
    %333 = vmatpush1.msra.mxu0 %v332
    %334 = vmatprep.subr.mxu0 0.0
    %v335 = vand.u32 %v86, 4294901760
    %v336 = vsub.f32 %v86, %v335
    %337 = vmatpush1.msra.mxu0 %v336
    %338 = vmatprep.subr.mxu0 0.0
    %v339 = vand.u32 %v85, 4294901760
    %v340 = vsub.f32 %v85, %v339
    %341 = vmatpush1.msra.mxu0 %v340
    %342 = vmatprep.subr.mxu0 0.0
    %v343 = vand.u32 %v84, 4294901760
    %v344 = vsub.f32 %v84, %v343
    %345 = vmatpush1.msra.mxu0 %v344
    %346 = vmatprep.subr.mxu0 0.0
    %v347 = vand.u32 %v83, 4294901760
    %v348 = vsub.f32 %v83, %v347
    %349 = vmatpush1.msra.mxu0 %v348
    %350 = vmatprep.subr.mxu0 0.0
    %v351 = vand.u32 %v82, 4294901760
    %v352 = vsub.f32 %v82, %v351
    %353 = vmatpush1.msra.mxu0 %v352
    %354 = vmatprep.subr.mxu0 0.0
    %v355 = vand.u32 %v81, 4294901760
    %v356 = vsub.f32 %v81, %v355
    %357 = vmatpush1.msra.mxu0 %v356
    %358 = vmatprep.subr.mxu0 0.0
    %v359 = vand.u32 %v80, 4294901760
    %v360 = vsub.f32 %v80, %v359
    %361 = vmatpush1.msra.mxu0 %v360
    %362 = vmatprep.subr.mxu0 0.0
    %v363 = vand.u32 %v79, 4294901760
    %v364 = vsub.f32 %v79, %v363
    %365 = vmatpush1.msra.mxu0 %v364
    %366 = vmatprep.subr.mxu0 0.0
    %v367 = vand.u32 %v78, 4294901760
    %v368 = vsub.f32 %v78, %v367
    %369 = vmatpush1.msra.mxu0 %v368
    %370 = vmatprep.subr.mxu0 0.0
    %v371 = vand.u32 %v77, 4294901760
    %v372 = vsub.f32 %v77, %v371
    %373 = vmatpush1.msra.mxu0 %v372
    %374 = vmatprep.subr.mxu0 0.0
    %v375 = vand.u32 %v76, 4294901760
    %v376 = vsub.f32 %v76, %v375
    %377 = vmatpush1.msra.mxu0 %v376
    %378 = vmatprep.subr.mxu0 0.0
    %v379 = vand.u32 %v75, 4294901760
    %v380 = vsub.f32 %v75, %v379
    %381 = vmatpush1.msra.mxu0 %v380
    %382 = vmatprep.subr.mxu0 0.0
    %v383 = vand.u32 %v74, 4294901760
    %v384 = vsub.f32 %v74, %v383
    %385 = vmatpush1.msra.mxu0 %v384
    %386 = vmatprep.subr.mxu0 0.0
    %v387 = vand.u32 %v73, 4294901760
    %v388 = vsub.f32 %v73, %v387
    %389 = vmatpush1.msra.mxu0 %v388
    %390 = vmatprep.subr.mxu0 0.0
    %v391 = vand.u32 %v72, 4294901760
    %v392 = vsub.f32 %v72, %v391
    %393 = vmatpush1.msra.mxu0 %v392
    %394 = vmatprep.subr.mxu0 0.0
    %395 = vmatpush2.msra.mxu0 0.0
    %396 = vmatprep.subr.mxu0 0.0
    %397 = vmatpush2.msra.mxu0 0.0
    %398 = vmatprep.subr.mxu0 0.0
    %399 = vmatpush2.msra.mxu0 0.0
    %400 = vmatprep.subr.mxu0 0.0
    %401 = vmatpush2.msra.mxu0 0.0
    %402 = vmatprep.subr.mxu0 0.0
    %403 = vmatpush2.msra.mxu0 0.0
    %404 = vmatprep.subr.mxu0 0.0
    %405 = vmatpush2.msra.mxu0 0.0
    %406 = vmatprep.subr.mxu0 0.0
    %407 = vmatpush2.msra.mxu0 0.0
    %408 = vmatprep.subr.mxu0 0.0
    %409 = vmatpush2.msra.mxu0 0.0
    %410 = vmatprep.subr.mxu0 0.0
    %411 = vmatpush2.msra.mxu0 0.0
    %412 = vmatprep.subr.mxu0 0.0
    %413 = vmatpush2.msra.mxu0 0.0
    %414 = vmatprep.subr.mxu0 0.0
    %415 = vmatpush2.msra.mxu0 0.0
    %416 = vmatprep.subr.mxu0 0.0
    %417 = vmatpush2.msra.mxu0 0.0
    %418 = vmatprep.subr.mxu0 0.0
    %419 = vmatpush2.msra.mxu0 0.0
    %420 = vmatprep.subr.mxu0 0.0
    %421 = vmatpush2.msra.mxu0 0.0
    %422 = vmatprep.subr.mxu0 0.0
    %423 = vmatpush2.msra.mxu0 0.0
    %424 = vmatprep.subr.mxu0 0.0
    %425 = vmatpush2.msra.mxu0 0.0
    %426 = vmatprep.mubr.f32.mxu0 0.0
    %v427 = vand.u32 %v71, 4294901760
    %v428 = vsub.f32 %v71, %v427
    %429 = vmatmul.mubr.f32.gmra.mxu0 %v428
    %v430 = vpop.f32.mrf.mxu0
    %v431 = vadd.f32 %v327, %v430
    %v432 = vpop.f32.mrf.mxu0
    %433 = vdwg.mxu0
    %434 = vmatprep.subr.mxu0 0.0
    %v435 = vand.u32 %v87, 4294901760
    %436 = vmatpush1.msra.mxu0 %v435
    %437 = vmatprep.subr.mxu0 0.0
    %v438 = vand.u32 %v86, 4294901760
    %439 = vmatpush1.msra.mxu0 %v438
    %440 = vmatprep.subr.mxu0 0.0
    %v441 = vand.u32 %v85, 4294901760
    %442 = vmatpush1.msra.mxu0 %v441
    %443 = vmatprep.subr.mxu0 0.0
    %v444 = vand.u32 %v84, 4294901760
    %445 = vmatpush1.msra.mxu0 %v444
    %446 = vmatprep.subr.mxu0 0.0
    %v447 = vand.u32 %v83, 4294901760
    %448 = vmatpush1.msra.mxu0 %v447
    %449 = vmatprep.subr.mxu0 0.0
    %v450 = vand.u32 %v82, 4294901760
    %451 = vmatpush1.msra.mxu0 %v450
    %452 = vmatprep.subr.mxu0 0.0
    %v453 = vand.u32 %v81, 4294901760
    %454 = vmatpush1.msra.mxu0 %v453
    %455 = vmatprep.subr.mxu0 0.0
    %v456 = vand.u32 %v80, 4294901760
    %457 = vmatpush1.msra.mxu0 %v456
    %458 = vmatprep.subr.mxu0 0.0
    %v459 = vand.u32 %v79, 4294901760
    %460 = vmatpush1.msra.mxu0 %v459
    %461 = vmatprep.subr.mxu0 0.0
    %v462 = vand.u32 %v78, 4294901760
    %463 = vmatpush1.msra.mxu0 %v462
    %464 = vmatprep.subr.mxu0 0.0
    %v465 = vand.u32 %v77, 4294901760
    %466 = vmatpush1.msra.mxu0 %v465
    %467 = vmatprep.subr.mxu0 0.0
    %v468 = vand.u32 %v76, 4294901760
    %469 = vmatpush1.msra.mxu0 %v468
    %470 = vmatprep.subr.mxu0 0.0
    %v471 = vand.u32 %v75, 4294901760
    %472 = vmatpush1.msra.mxu0 %v471
    %473 = vmatprep.subr.mxu0 0.0
    %v474 = vand.u32 %v74, 4294901760
    %475 = vmatpush1.msra.mxu0 %v474
    %476 = vmatprep.subr.mxu0 0.0
    %v477 = vand.u32 %v73, 4294901760
    %478 = vmatpush1.msra.mxu0 %v477
    %479 = vmatprep.subr.mxu0 0.0
    %v480 = vand.u32 %v72, 4294901760
    %481 = vmatpush1.msra.mxu0 %v480
    %482 = vmatprep.subr.mxu0 0.0
    %483 = vmatpush2.msra.mxu0 0.0
    %484 = vmatprep.subr.mxu0 0.0
    %485 = vmatpush2.msra.mxu0 0.0
    %486 = vmatprep.subr.mxu0 0.0
    %487 = vmatpush2.msra.mxu0 0.0
    %488 = vmatprep.subr.mxu0 0.0
    %489 = vmatpush2.msra.mxu0 0.0
    %490 = vmatprep.subr.mxu0 0.0
    %491 = vmatpush2.msra.mxu0 0.0
    %492 = vmatprep.subr.mxu0 0.0
    %493 = vmatpush2.msra.mxu0 0.0
    %494 = vmatprep.subr.mxu0 0.0
    %495 = vmatpush2.msra.mxu0 0.0
    %496 = vmatprep.subr.mxu0 0.0
    %497 = vmatpush2.msra.mxu0 0.0
    %498 = vmatprep.subr.mxu0 0.0
    %499 = vmatpush2.msra.mxu0 0.0
    %500 = vmatprep.subr.mxu0 0.0
    %501 = vmatpush2.msra.mxu0 0.0
    %502 = vmatprep.subr.mxu0 0.0
    %503 = vmatpush2.msra.mxu0 0.0
    %504 = vmatprep.subr.mxu0 0.0
    %505 = vmatpush2.msra.mxu0 0.0
    %506 = vmatprep.subr.mxu0 0.0
    %507 = vmatpush2.msra.mxu0 0.0
    %508 = vmatprep.subr.mxu0 0.0
    %509 = vmatpush2.msra.mxu0 0.0
    %510 = vmatprep.subr.mxu0 0.0
    %511 = vmatpush2.msra.mxu0 0.0
    %512 = vmatprep.subr.mxu0 0.0
    %513 = vmatpush2.msra.mxu0 0.0
    %514 = vmatprep.mubr.f32.mxu0 0.0
    %v515 = vand.u32 %v71, 4294901760
    %v516 = vsub.f32 %v71, %v515
    %v517 = vand.u32 %v516, 4294901760
    %518 = vmatmul.mubr.f32.gmra.mxu0 %v517
    %v519 = vpop.f32.mrf.mxu0
    %v520 = vadd.f32 %v431, %v519
    %v521 = vpop.f32.mrf.mxu0
    %522 = vdwg.mxu0
    %523 = vmatprep.subr.mxu0 0.0
    %v524 = vand.u32 %v87, 4294901760
    %v525 = vsub.f32 %v87, %v524
    %v526 = vand.u32 %v525, 4294901760
    %527 = vmatpush1.msra.mxu0 %v526
    %528 = vmatprep.subr.mxu0 0.0
    %v529 = vand.u32 %v86, 4294901760
    %v530 = vsub.f32 %v86, %v529
    %v531 = vand.u32 %v530, 4294901760
    %532 = vmatpush1.msra.mxu0 %v531
    %533 = vmatprep.subr.mxu0 0.0
    %v534 = vand.u32 %v85, 4294901760
    %v535 = vsub.f32 %v85, %v534
    %v536 = vand.u32 %v535, 4294901760
    %537 = vmatpush1.msra.mxu0 %v536
    %538 = vmatprep.subr.mxu0 0.0
    %v539 = vand.u32 %v84, 4294901760
    %v540 = vsub.f32 %v84, %v539
    %v541 = vand.u32 %v540, 4294901760
    %542 = vmatpush1.msra.mxu0 %v541
    %543 = vmatprep.subr.mxu0 0.0
    %v544 = vand.u32 %v83, 4294901760
    %v545 = vsub.f32 %v83, %v544
    %v546 = vand.u32 %v545, 4294901760
    %547 = vmatpush1.msra.mxu0 %v546
    %548 = vmatprep.subr.mxu0 0.0
    %v549 = vand.u32 %v82, 4294901760
    %v550 = vsub.f32 %v82, %v549
    %v551 = vand.u32 %v550, 4294901760
    %552 = vmatpush1.msra.mxu0 %v551
    %553 = vmatprep.subr.mxu0 0.0
    %v554 = vand.u32 %v81, 4294901760
    %v555 = vsub.f32 %v81, %v554
    %v556 = vand.u32 %v555, 4294901760
    %557 = vmatpush1.msra.mxu0 %v556
    %558 = vmatprep.subr.mxu0 0.0
    %v559 = vand.u32 %v80, 4294901760
    %v560 = vsub.f32 %v80, %v559
    %v561 = vand.u32 %v560, 4294901760
    %562 = vmatpush1.msra.mxu0 %v561
    %563 = vmatprep.subr.mxu0 0.0
    %v564 = vand.u32 %v79, 4294901760
    %v565 = vsub.f32 %v79, %v564
    %v566 = vand.u32 %v565, 4294901760
    %567 = vmatpush1.msra.mxu0 %v566
    %568 = vmatprep.subr.mxu0 0.0
    %v569 = vand.u32 %v78, 4294901760
    %v570 = vsub.f32 %v78, %v569
    %v571 = vand.u32 %v570, 4294901760
    %572 = vmatpush1.msra.mxu0 %v571
    %573 = vmatprep.subr.mxu0 0.0
    %v574 = vand.u32 %v77, 4294901760
    %v575 = vsub.f32 %v77, %v574
    %v576 = vand.u32 %v575, 4294901760
    %577 = vmatpush1.msra.mxu0 %v576
    %578 = vmatprep.subr.mxu0 0.0
    %v579 = vand.u32 %v76, 4294901760
    %v580 = vsub.f32 %v76, %v579
    %v581 = vand.u32 %v580, 4294901760
    %582 = vmatpush1.msra.mxu0 %v581
    %583 = vmatprep.subr.mxu0 0.0
    %v584 = vand.u32 %v75, 4294901760
    %v585 = vsub.f32 %v75, %v584
    %v586 = vand.u32 %v585, 4294901760
    %587 = vmatpush1.msra.mxu0 %v586
    %588 = vmatprep.subr.mxu0 0.0
    %v589 = vand.u32 %v74, 4294901760
    %v590 = vsub.f32 %v74, %v589
    %v591 = vand.u32 %v590, 4294901760
    %592 = vmatpush1.msra.mxu0 %v591
    %593 = vmatprep.subr.mxu0 0.0
    %v594 = vand.u32 %v73, 4294901760
    %v595 = vsub.f32 %v73, %v594
    %v596 = vand.u32 %v595, 4294901760
    %597 = vmatpush1.msra.mxu0 %v596
    %598 = vmatprep.subr.mxu0 0.0
    %v599 = vand.u32 %v72, 4294901760
    %v600 = vsub.f32 %v72, %v599
    %v601 = vand.u32 %v600, 4294901760
    %602 = vmatpush1.msra.mxu0 %v601
    %603 = vmatprep.subr.mxu0 0.0
    %604 = vmatpush2.msra.mxu0 0.0
    %605 = vmatprep.subr.mxu0 0.0
    %606 = vmatpush2.msra.mxu0 0.0
    %607 = vmatprep.subr.mxu0 0.0
    %608 = vmatpush2.msra.mxu0 0.0
    %609 = vmatprep.subr.mxu0 0.0
    %610 = vmatpush2.msra.mxu0 0.0
    %611 = vmatprep.subr.mxu0 0.0
    %612 = vmatpush2.msra.mxu0 0.0
    %613 = vmatprep.subr.mxu0 0.0
    %614 = vmatpush2.msra.mxu0 0.0
    %615 = vmatprep.subr.mxu0 0.0
    %616 = vmatpush2.msra.mxu0 0.0
    %617 = vmatprep.subr.mxu0 0.0
    %618 = vmatpush2.msra.mxu0 0.0
    %619 = vmatprep.subr.mxu0 0.0
    %620 = vmatpush2.msra.mxu0 0.0
    %621 = vmatprep.subr.mxu0 0.0
    %622 = vmatpush2.msra.mxu0 0.0
    %623 = vmatprep.subr.mxu0 0.0
    %624 = vmatpush2.msra.mxu0 0.0
    %625 = vmatprep.subr.mxu0 0.0
    %626 = vmatpush2.msra.mxu0 0.0
    %627 = vmatprep.subr.mxu0 0.0
    %628 = vmatpush2.msra.mxu0 0.0
    %629 = vmatprep.subr.mxu0 0.0
    %630 = vmatpush2.msra.mxu0 0.0
    %631 = vmatprep.subr.mxu0 0.0
    %632 = vmatpush2.msra.mxu0 0.0
    %633 = vmatprep.subr.mxu0 0.0
    %634 = vmatpush2.msra.mxu0 0.0
    %635 = vmatprep.mubr.f32.mxu0 0.0
    %v636 = vand.u32 %v71, 4294901760
    %637 = vmatmul.mubr.f32.gmra.mxu0 %v636
    %v638 = vpop.f32.mrf.mxu0
    %v639 = vadd.f32 %v520, %v638
    %v640 = vpop.f32.mrf.mxu0
    %641 = vdwg.mxu0
    %642 = vmatprep.subr.mxu0 0.0
    %v643 = vand.u32 %v87, 4294901760
    %644 = vmatpush1.msra.mxu0 %v643
    %645 = vmatprep.subr.mxu0 0.0
    %v646 = vand.u32 %v86, 4294901760
    %647 = vmatpush1.msra.mxu0 %v646
    %648 = vmatprep.subr.mxu0 0.0
    %v649 = vand.u32 %v85, 4294901760
    %650 = vmatpush1.msra.mxu0 %v649
    %651 = vmatprep.subr.mxu0 0.0
    %v652 = vand.u32 %v84, 4294901760
    %653 = vmatpush1.msra.mxu0 %v652
    %654 = vmatprep.subr.mxu0 0.0
    %v655 = vand.u32 %v83, 4294901760
    %656 = vmatpush1.msra.mxu0 %v655
    %657 = vmatprep.subr.mxu0 0.0
    %v658 = vand.u32 %v82, 4294901760
    %659 = vmatpush1.msra.mxu0 %v658
    %660 = vmatprep.subr.mxu0 0.0
    %v661 = vand.u32 %v81, 4294901760
    %662 = vmatpush1.msra.mxu0 %v661
    %663 = vmatprep.subr.mxu0 0.0
    %v664 = vand.u32 %v80, 4294901760
    %665 = vmatpush1.msra.mxu0 %v664
    %666 = vmatprep.subr.mxu0 0.0
    %v667 = vand.u32 %v79, 4294901760
    %668 = vmatpush1.msra.mxu0 %v667
    %669 = vmatprep.subr.mxu0 0.0
    %v670 = vand.u32 %v78, 4294901760
    %671 = vmatpush1.msra.mxu0 %v670
    %672 = vmatprep.subr.mxu0 0.0
    %v673 = vand.u32 %v77, 4294901760
    %674 = vmatpush1.msra.mxu0 %v673
    %675 = vmatprep.subr.mxu0 0.0
    %v676 = vand.u32 %v76, 4294901760
    %677 = vmatpush1.msra.mxu0 %v676
    %678 = vmatprep.subr.mxu0 0.0
    %v679 = vand.u32 %v75, 4294901760
    %680 = vmatpush1.msra.mxu0 %v679
    %681 = vmatprep.subr.mxu0 0.0
    %v682 = vand.u32 %v74, 4294901760
    %683 = vmatpush1.msra.mxu0 %v682
    %684 = vmatprep.subr.mxu0 0.0
    %v685 = vand.u32 %v73, 4294901760
    %686 = vmatpush1.msra.mxu0 %v685
    %687 = vmatprep.subr.mxu0 0.0
    %v688 = vand.u32 %v72, 4294901760
    %689 = vmatpush1.msra.mxu0 %v688
    %690 = vmatprep.subr.mxu0 0.0
    %691 = vmatpush2.msra.mxu0 0.0
    %692 = vmatprep.subr.mxu0 0.0
    %693 = vmatpush2.msra.mxu0 0.0
    %694 = vmatprep.subr.mxu0 0.0
    %695 = vmatpush2.msra.mxu0 0.0
    %696 = vmatprep.subr.mxu0 0.0
    %697 = vmatpush2.msra.mxu0 0.0
    %698 = vmatprep.subr.mxu0 0.0
    %699 = vmatpush2.msra.mxu0 0.0
    %700 = vmatprep.subr.mxu0 0.0
    %701 = vmatpush2.msra.mxu0 0.0
    %702 = vmatprep.subr.mxu0 0.0
    %703 = vmatpush2.msra.mxu0 0.0
    %704 = vmatprep.subr.mxu0 0.0
    %705 = vmatpush2.msra.mxu0 0.0
    %706 = vmatprep.subr.mxu0 0.0
    %707 = vmatpush2.msra.mxu0 0.0
    %708 = vmatprep.subr.mxu0 0.0
    %709 = vmatpush2.msra.mxu0 0.0
    %710 = vmatprep.subr.mxu0 0.0
    %711 = vmatpush2.msra.mxu0 0.0
    %712 = vmatprep.subr.mxu0 0.0
    %713 = vmatpush2.msra.mxu0 0.0
    %714 = vmatprep.subr.mxu0 0.0
    %715 = vmatpush2.msra.mxu0 0.0
    %716 = vmatprep.subr.mxu0 0.0
    %717 = vmatpush2.msra.mxu0 0.0
    %718 = vmatprep.subr.mxu0 0.0
    %719 = vmatpush2.msra.mxu0 0.0
    %720 = vmatprep.subr.mxu0 0.0
    %721 = vmatpush2.msra.mxu0 0.0
    %722 = vmatprep.mubr.f32.mxu0 0.0
    %v723 = vand.u32 %v71, 4294901760
    %724 = vmatmul.mubr.f32.gmra.mxu0 %v723
    %v725 = vpop.f32.mrf.mxu0
    %v726 = vadd.f32 %v639, %v725
    %v727 = vpop.f32.mrf.mxu0
    %728 = vdwg.mxu0
    %v729 = vld [vmem:[#allocation8] sm:$0xff]
    %v730 = vld [vmem:[#allocation8 + $0x8] sm:$0xff]
    %v731 = vld [vmem:[#allocation8 + $0x10] sm:$0xff]
    %v732 = vld [vmem:[#allocation8 + $0x18] sm:$0xff]
    %v733 = vld [vmem:[#allocation8 + $0x20] sm:$0xff]
    %v734 = vld [vmem:[#allocation8 + $0x28] sm:$0xff]
    %v735 = vld [vmem:[#allocation8 + $0x30] sm:$0xff]
    %v736 = vld [vmem:[#allocation8 + $0x38] sm:$0xff]
    %v737 = vld [vmem:[#allocation8 + $0x40] sm:$0xff]
    %v738 = vld [vmem:[#allocation8 + $0x48] sm:$0xff]
    %v739 = vld [vmem:[#allocation8 + $0x50] sm:$0xff]
    %v740 = vld [vmem:[#allocation8 + $0x58] sm:$0xff]
    %v741 = vld [vmem:[#allocation8 + $0x60] sm:$0xff]
    %v742 = vld [vmem:[#allocation8 + $0x68] sm:$0xff]
    %v743 = vld [vmem:[#allocation8 + $0x70] sm:$0xff]
    %v744 = vld [vmem:[#allocation8 + $0x78] sm:$0xff]
    %745 = vmatprep.subr.mxu0 0.0
    %v746 = vand.u32 %v744, 4294901760
    %747 = vmatpush1.msra.mxu0 %v746
    %748 = vmatprep.subr.mxu0 0.0
    %v749 = vand.u32 %v743, 4294901760
    %750 = vmatpush1.msra.mxu0 %v749
    %751 = vmatprep.subr.mxu0 0.0
    %v752 = vand.u32 %v742, 4294901760
    %753 = vmatpush1.msra.mxu0 %v752
    %754 = vmatprep.subr.mxu0 0.0
    %v755 = vand.u32 %v741, 4294901760
    %756 = vmatpush1.msra.mxu0 %v755
    %757 = vmatprep.subr.mxu0 0.0
    %v758 = vand.u32 %v740, 4294901760
    %759 = vmatpush1.msra.mxu0 %v758
    %760 = vmatprep.subr.mxu0 0.0
    %v761 = vand.u32 %v739, 4294901760
    %762 = vmatpush1.msra.mxu0 %v761
    %763 = vmatprep.subr.mxu0 0.0
    %v764 = vand.u32 %v738, 4294901760
    %765 = vmatpush1.msra.mxu0 %v764
    %766 = vmatprep.subr.mxu0 0.0
    %v767 = vand.u32 %v737, 4294901760
    %768 = vmatpush1.msra.mxu0 %v767
    %769 = vmatprep.subr.mxu0 0.0
    %v770 = vand.u32 %v736, 4294901760
    %771 = vmatpush1.msra.mxu0 %v770
    %772 = vmatprep.subr.mxu0 0.0
    %v773 = vand.u32 %v735, 4294901760
    %774 = vmatpush1.msra.mxu0 %v773
    %775 = vmatprep.subr.mxu0 0.0
    %v776 = vand.u32 %v734, 4294901760
    %777 = vmatpush1.msra.mxu0 %v776
    %778 = vmatprep.subr.mxu0 0.0
    %v779 = vand.u32 %v733, 4294901760
    %780 = vmatpush1.msra.mxu0 %v779
    %781 = vmatprep.subr.mxu0 0.0
    %v782 = vand.u32 %v732, 4294901760
    %783 = vmatpush1.msra.mxu0 %v782
    %784 = vmatprep.subr.mxu0 0.0
    %v785 = vand.u32 %v731, 4294901760
    %786 = vmatpush1.msra.mxu0 %v785
    %787 = vmatprep.subr.mxu0 0.0
    %v788 = vand.u32 %v730, 4294901760
    %789 = vmatpush1.msra.mxu0 %v788
    %790 = vmatprep.subr.mxu0 0.0
    %v791 = vand.u32 %v729, 4294901760
    %792 = vmatpush1.msra.mxu0 %v791
    %793 = vmatprep.subr.mxu0 0.0
    %794 = vmatpush2.msra.mxu0 0.0
    %795 = vmatprep.subr.mxu0 0.0
    %796 = vmatpush2.msra.mxu0 0.0
    %797 = vmatprep.subr.mxu0 0.0
    %798 = vmatpush2.msra.mxu0 0.0
    %799 = vmatprep.subr.mxu0 0.0
    %800 = vmatpush2.msra.mxu0 0.0
    %801 = vmatprep.subr.mxu0 0.0
    %802 = vmatpush2.msra.mxu0 0.0
    %803 = vmatprep.subr.mxu0 0.0
    %804 = vmatpush2.msra.mxu0 0.0
    %805 = vmatprep.subr.mxu0 0.0
    %806 = vmatpush2.msra.mxu0 0.0
    %807 = vmatprep.subr.mxu0 0.0
    %808 = vmatpush2.msra.mxu0 0.0
    %809 = vmatprep.subr.mxu0 0.0
    %810 = vmatpush2.msra.mxu0 0.0
    %811 = vmatprep.subr.mxu0 0.0
    %812 = vmatpush2.msra.mxu0 0.0
    %813 = vmatprep.subr.mxu0 0.0
    %814 = vmatpush2.msra.mxu0 0.0
    %815 = vmatprep.subr.mxu0 0.0
    %816 = vmatpush2.msra.mxu0 0.0
    %817 = vmatprep.subr.mxu0 0.0
    %818 = vmatpush2.msra.mxu0 0.0
    %819 = vmatprep.subr.mxu0 0.0
    %820 = vmatpush2.msra.mxu0 0.0
    %821 = vmatprep.subr.mxu0 0.0
    %822 = vmatpush2.msra.mxu0 0.0
    %823 = vmatprep.subr.mxu0 0.0
    %824 = vmatpush2.msra.mxu0 0.0
    %825 = vmatprep.mubr.f32.mxu0 0.0
    %v826 = vand.u32 %v726, 4294901760
    %v827 = vsub.f32 %v726, %v826
    %v828 = vand.u32 %v827, 4294901760
    %v829 = vsub.f32 %v827, %v828
    %v830 = vand.u32 %v829, 4294901760
    %831 = vmatmul.mubr.f32.gmra.mxu0 %v830
    %v832 = vpop.f32.mrf.mxu0
    %v833 = vadd.f32 0.0, %v832
    %v834 = vpop.f32.mrf.mxu0
    %835 = vdwg.mxu0
    %836 = vmatprep.subr.mxu0 0.0
    %v837 = vand.u32 %v744, 4294901760
    %v838 = vsub.f32 %v744, %v837
    %v839 = vand.u32 %v838, 4294901760
    %v840 = vsub.f32 %v838, %v839
    %v841 = vand.u32 %v840, 4294901760
    %842 = vmatpush1.msra.mxu0 %v841
    %843 = vmatprep.subr.mxu0 0.0
    %v844 = vand.u32 %v743, 4294901760
    %v845 = vsub.f32 %v743, %v844
    %v846 = vand.u32 %v845, 4294901760
    %v847 = vsub.f32 %v845, %v846
    %v848 = vand.u32 %v847, 4294901760
    %849 = vmatpush1.msra.mxu0 %v848
    %850 = vmatprep.subr.mxu0 0.0
    %v851 = vand.u32 %v742, 4294901760
    %v852 = vsub.f32 %v742, %v851
    %v853 = vand.u32 %v852, 4294901760
    %v854 = vsub.f32 %v852, %v853
    %v855 = vand.u32 %v854, 4294901760
    %856 = vmatpush1.msra.mxu0 %v855
    %857 = vmatprep.subr.mxu0 0.0
    %v858 = vand.u32 %v741, 4294901760
    %v859 = vsub.f32 %v741, %v858
    %v860 = vand.u32 %v859, 4294901760
    %v861 = vsub.f32 %v859, %v860
    %v862 = vand.u32 %v861, 4294901760
    %863 = vmatpush1.msra.mxu0 %v862
    %864 = vmatprep.subr.mxu0 0.0
    %v865 = vand.u32 %v740, 4294901760
    %v866 = vsub.f32 %v740, %v865
    %v867 = vand.u32 %v866, 4294901760
    %v868 = vsub.f32 %v866, %v867
    %v869 = vand.u32 %v868, 4294901760
    %870 = vmatpush1.msra.mxu0 %v869
    %871 = vmatprep.subr.mxu0 0.0
    %v872 = vand.u32 %v739, 4294901760
    %v873 = vsub.f32 %v739, %v872
    %v874 = vand.u32 %v873, 4294901760
    %v875 = vsub.f32 %v873, %v874
    %v876 = vand.u32 %v875, 4294901760
    %877 = vmatpush1.msra.mxu0 %v876
    %878 = vmatprep.subr.mxu0 0.0
    %v879 = vand.u32 %v738, 4294901760
    %v880 = vsub.f32 %v738, %v879
    %v881 = vand.u32 %v880, 4294901760
    %v882 = vsub.f32 %v880, %v881
    %v883 = vand.u32 %v882, 4294901760
    %884 = vmatpush1.msra.mxu0 %v883
    %885 = vmatprep.subr.mxu0 0.0
    %v886 = vand.u32 %v737, 4294901760
    %v887 = vsub.f32 %v737, %v886
    %v888 = vand.u32 %v887, 4294901760
    %v889 = vsub.f32 %v887, %v888
    %v890 = vand.u32 %v889, 4294901760
    %891 = vmatpush1.msra.mxu0 %v890
    %892 = vmatprep.subr.mxu0 0.0
    %v893 = vand.u32 %v736, 4294901760
    %v894 = vsub.f32 %v736, %v893
    %v895 = vand.u32 %v894, 4294901760
    %v896 = vsub.f32 %v894, %v895
    %v897 = vand.u32 %v896, 4294901760
    %898 = vmatpush1.msra.mxu0 %v897
    %899 = vmatprep.subr.mxu0 0.0
    %v900 = vand.u32 %v735, 4294901760
    %v901 = vsub.f32 %v735, %v900
    %v902 = vand.u32 %v901, 4294901760
    %v903 = vsub.f32 %v901, %v902
    %v904 = vand.u32 %v903, 4294901760
    %905 = vmatpush1.msra.mxu0 %v904
    %906 = vmatprep.subr.mxu0 0.0
    %v907 = vand.u32 %v734, 4294901760
    %v908 = vsub.f32 %v734, %v907
    %v909 = vand.u32 %v908, 4294901760
    %v910 = vsub.f32 %v908, %v909
    %v911 = vand.u32 %v910, 4294901760
    %912 = vmatpush1.msra.mxu0 %v911
    %913 = vmatprep.subr.mxu0 0.0
    %v914 = vand.u32 %v733, 4294901760
    %v915 = vsub.f32 %v733, %v914
    %v916 = vand.u32 %v915, 4294901760
    %v917 = vsub.f32 %v915, %v916
    %v918 = vand.u32 %v917, 4294901760
    %919 = vmatpush1.msra.mxu0 %v918
    %920 = vmatprep.subr.mxu0 0.0
    %v921 = vand.u32 %v732, 4294901760
    %v922 = vsub.f32 %v732, %v921
    %v923 = vand.u32 %v922, 4294901760
    %v924 = vsub.f32 %v922, %v923
    %v925 = vand.u32 %v924, 4294901760
    %926 = vmatpush1.msra.mxu0 %v925
    %927 = vmatprep.subr.mxu0 0.0
    %v928 = vand.u32 %v731, 4294901760
    %v929 = vsub.f32 %v731, %v928
    %v930 = vand.u32 %v929, 4294901760
    %v931 = vsub.f32 %v929, %v930
    %v932 = vand.u32 %v931, 4294901760
    %933 = vmatpush1.msra.mxu0 %v932
    %934 = vmatprep.subr.mxu0 0.0
    %v935 = vand.u32 %v730, 4294901760
    %v936 = vsub.f32 %v730, %v935
    %v937 = vand.u32 %v936, 4294901760
    %v938 = vsub.f32 %v936, %v937
    %v939 = vand.u32 %v938, 4294901760
    %940 = vmatpush1.msra.mxu0 %v939
    %941 = vmatprep.subr.mxu0 0.0
    %v942 = vand.u32 %v729, 4294901760
    %v943 = vsub.f32 %v729, %v942
    %v944 = vand.u32 %v943, 4294901760
    %v945 = vsub.f32 %v943, %v944
    %v946 = vand.u32 %v945, 4294901760
    %947 = vmatpush1.msra.mxu0 %v946
    %948 = vmatprep.subr.mxu0 0.0
    %949 = vmatpush2.msra.mxu0 0.0
    %950 = vmatprep.subr.mxu0 0.0
    %951 = vmatpush2.msra.mxu0 0.0
    %952 = vmatprep.subr.mxu0 0.0
    %953 = vmatpush2.msra.mxu0 0.0
    %954 = vmatprep.subr.mxu0 0.0
    %955 = vmatpush2.msra.mxu0 0.0
    %956 = vmatprep.subr.mxu0 0.0
    %957 = vmatpush2.msra.mxu0 0.0
    %958 = vmatprep.subr.mxu0 0.0
    %959 = vmatpush2.msra.mxu0 0.0
    %960 = vmatprep.subr.mxu0 0.0
    %961 = vmatpush2.msra.mxu0 0.0
    %962 = vmatprep.subr.mxu0 0.0
    %963 = vmatpush2.msra.mxu0 0.0
    %964 = vmatprep.subr.mxu0 0.0
    %965 = vmatpush2.msra.mxu0 0.0
    %966 = vmatprep.subr.mxu0 0.0
    %967 = vmatpush2.msra.mxu0 0.0
    %968 = vmatprep.subr.mxu0 0.0
    %969 = vmatpush2.msra.mxu0 0.0
    %970 = vmatprep.subr.mxu0 0.0
    %971 = vmatpush2.msra.mxu0 0.0
    %972 = vmatprep.subr.mxu0 0.0
    %973 = vmatpush2.msra.mxu0 0.0
    %974 = vmatprep.subr.mxu0 0.0
    %975 = vmatpush2.msra.mxu0 0.0
    %976 = vmatprep.subr.mxu0 0.0
    %977 = vmatpush2.msra.mxu0 0.0
    %978 = vmatprep.subr.mxu0 0.0
    %979 = vmatpush2.msra.mxu0 0.0
    %980 = vmatprep.mubr.f32.mxu0 0.0
    %v981 = vand.u32 %v726, 4294901760
    %982 = vmatmul.mubr.f32.gmra.mxu0 %v981
    %v983 = vpop.f32.mrf.mxu0
    %v984 = vadd.f32 %v833, %v983
    %v985 = vpop.f32.mrf.mxu0
    %986 = vdwg.mxu0
    %987 = vmatprep.subr.mxu0 0.0
    %v988 = vand.u32 %v744, 4294901760
    %v989 = vsub.f32 %v744, %v988
    %990 = vmatpush1.msra.mxu0 %v989
    %991 = vmatprep.subr.mxu0 0.0
    %v992 = vand.u32 %v743, 4294901760
    %v993 = vsub.f32 %v743, %v992
    %994 = vmatpush1.msra.mxu0 %v993
    %995 = vmatprep.subr.mxu0 0.0
    %v996 = vand.u32 %v742, 4294901760
    %v997 = vsub.f32 %v742, %v996
    %998 = vmatpush1.msra.mxu0 %v997
    %999 = vmatprep.subr.mxu0 0.0
    %v1000 = vand.u32 %v741, 4294901760
    %v1001 = vsub.f32 %v741, %v1000
    %1002 = vmatpush1.msra.mxu0 %v1001
    %1003 = vmatprep.subr.mxu0 0.0
    %v1004 = vand.u32 %v740, 4294901760
    %v1005 = vsub.f32 %v740, %v1004
    %1006 = vmatpush1.msra.mxu0 %v1005
    %1007 = vmatprep.subr.mxu0 0.0
    %v1008 = vand.u32 %v739, 4294901760
    %v1009 = vsub.f32 %v739, %v1008
    %1010 = vmatpush1.msra.mxu0 %v1009
    %1011 = vmatprep.subr.mxu0 0.0
    %v1012 = vand.u32 %v738, 4294901760
    %v1013 = vsub.f32 %v738, %v1012
    %1014 = vmatpush1.msra.mxu0 %v1013
    %1015 = vmatprep.subr.mxu0 0.0
    %v1016 = vand.u32 %v737, 4294901760
    %v1017 = vsub.f32 %v737, %v1016
    %1018 = vmatpush1.msra.mxu0 %v1017
    %1019 = vmatprep.subr.mxu0 0.0
    %v1020 = vand.u32 %v736, 4294901760
    %v1021 = vsub.f32 %v736, %v1020
    %1022 = vmatpush1.msra.mxu0 %v1021
    %1023 = vmatprep.subr.mxu0 0.0
    %v1024 = vand.u32 %v735, 4294901760
    %v1025 = vsub.f32 %v735, %v1024
    %1026 = vmatpush1.msra.mxu0 %v1025
    %1027 = vmatprep.subr.mxu0 0.0
    %v1028 = vand.u32 %v734, 4294901760
    %v1029 = vsub.f32 %v734, %v1028
    %1030 = vmatpush1.msra.mxu0 %v1029
    %1031 = vmatprep.subr.mxu0 0.0
    %v1032 = vand.u32 %v733, 4294901760
    %v1033 = vsub.f32 %v733, %v1032
    %1034 = vmatpush1.msra.mxu0 %v1033
    %1035 = vmatprep.subr.mxu0 0.0
    %v1036 = vand.u32 %v732, 4294901760
    %v1037 = vsub.f32 %v732, %v1036
    %1038 = vmatpush1.msra.mxu0 %v1037
    %1039 = vmatprep.subr.mxu0 0.0
    %v1040 = vand.u32 %v731, 4294901760
    %v1041 = vsub.f32 %v731, %v1040
    %1042 = vmatpush1.msra.mxu0 %v1041
    %1043 = vmatprep.subr.mxu0 0.0
    %v1044 = vand.u32 %v730, 4294901760
    %v1045 = vsub.f32 %v730, %v1044
    %1046 = vmatpush1.msra.mxu0 %v1045
    %1047 = vmatprep.subr.mxu0 0.0
    %v1048 = vand.u32 %v729, 4294901760
    %v1049 = vsub.f32 %v729, %v1048
    %1050 = vmatpush1.msra.mxu0 %v1049
    %1051 = vmatprep.subr.mxu0 0.0
    %1052 = vmatpush2.msra.mxu0 0.0
    %1053 = vmatprep.subr.mxu0 0.0
    %1054 = vmatpush2.msra.mxu0 0.0
    %1055 = vmatprep.subr.mxu0 0.0
    %1056 = vmatpush2.msra.mxu0 0.0
    %1057 = vmatprep.subr.mxu0 0.0
    %1058 = vmatpush2.msra.mxu0 0.0
    %1059 = vmatprep.subr.mxu0 0.0
    %1060 = vmatpush2.msra.mxu0 0.0
    %1061 = vmatprep.subr.mxu0 0.0
    %1062 = vmatpush2.msra.mxu0 0.0
    %1063 = vmatprep.subr.mxu0 0.0
    %1064 = vmatpush2.msra.mxu0 0.0
    %1065 = vmatprep.subr.mxu0 0.0
    %1066 = vmatpush2.msra.mxu0 0.0
    %1067 = vmatprep.subr.mxu0 0.0
    %1068 = vmatpush2.msra.mxu0 0.0
    %1069 = vmatprep.subr.mxu0 0.0
    %1070 = vmatpush2.msra.mxu0 0.0
    %1071 = vmatprep.subr.mxu0 0.0
    %1072 = vmatpush2.msra.mxu0 0.0
    %1073 = vmatprep.subr.mxu0 0.0
    %1074 = vmatpush2.msra.mxu0 0.0
    %1075 = vmatprep.subr.mxu0 0.0
    %1076 = vmatpush2.msra.mxu0 0.0
    %1077 = vmatprep.subr.mxu0 0.0
    %1078 = vmatpush2.msra.mxu0 0.0
    %1079 = vmatprep.subr.mxu0 0.0
    %1080 = vmatpush2.msra.mxu0 0.0
    %1081 = vmatprep.subr.mxu0 0.0
    %1082 = vmatpush2.msra.mxu0 0.0
    %1083 = vmatprep.mubr.f32.mxu0 0.0
    %v1084 = vand.u32 %v726, 4294901760
    %v1085 = vsub.f32 %v726, %v1084
    %1086 = vmatmul.mubr.f32.gmra.mxu0 %v1085
    %v1087 = vpop.f32.mrf.mxu0
    %v1088 = vadd.f32 %v984, %v1087
    %v1089 = vpop.f32.mrf.mxu0
    %1090 = vdwg.mxu0
    %1091 = vmatprep.subr.mxu0 0.0
    %v1092 = vand.u32 %v744, 4294901760
    %1093 = vmatpush1.msra.mxu0 %v1092
    %1094 = vmatprep.subr.mxu0 0.0
    %v1095 = vand.u32 %v743, 4294901760
    %1096 = vmatpush1.msra.mxu0 %v1095
    %1097 = vmatprep.subr.mxu0 0.0
    %v1098 = vand.u32 %v742, 4294901760
    %1099 = vmatpush1.msra.mxu0 %v1098
    %1100 = vmatprep.subr.mxu0 0.0
    %v1101 = vand.u32 %v741, 4294901760
    %1102 = vmatpush1.msra.mxu0 %v1101
    %1103 = vmatprep.subr.mxu0 0.0
    %v1104 = vand.u32 %v740, 4294901760
    %1105 = vmatpush1.msra.mxu0 %v1104
    %1106 = vmatprep.subr.mxu0 0.0
    %v1107 = vand.u32 %v739, 4294901760
    %1108 = vmatpush1.msra.mxu0 %v1107
    %1109 = vmatprep.subr.mxu0 0.0
    %v1110 = vand.u32 %v738, 4294901760
    %1111 = vmatpush1.msra.mxu0 %v1110
    %1112 = vmatprep.subr.mxu0 0.0
    %v1113 = vand.u32 %v737, 4294901760
    %1114 = vmatpush1.msra.mxu0 %v1113
    %1115 = vmatprep.subr.mxu0 0.0
    %v1116 = vand.u32 %v736, 4294901760
    %1117 = vmatpush1.msra.mxu0 %v1116
    %1118 = vmatprep.subr.mxu0 0.0
    %v1119 = vand.u32 %v735, 4294901760
    %1120 = vmatpush1.msra.mxu0 %v1119
    %1121 = vmatprep.subr.mxu0 0.0
    %v1122 = vand.u32 %v734, 4294901760
    %1123 = vmatpush1.msra.mxu0 %v1122
    %1124 = vmatprep.subr.mxu0 0.0
    %v1125 = vand.u32 %v733, 4294901760
    %1126 = vmatpush1.msra.mxu0 %v1125
    %1127 = vmatprep.subr.mxu0 0.0
    %v1128 = vand.u32 %v732, 4294901760
    %1129 = vmatpush1.msra.mxu0 %v1128
    %1130 = vmatprep.subr.mxu0 0.0
    %v1131 = vand.u32 %v731, 4294901760
    %1132 = vmatpush1.msra.mxu0 %v1131
    %1133 = vmatprep.subr.mxu0 0.0
    %v1134 = vand.u32 %v730, 4294901760
    %1135 = vmatpush1.msra.mxu0 %v1134
    %1136 = vmatprep.subr.mxu0 0.0
    %v1137 = vand.u32 %v729, 4294901760
    %1138 = vmatpush1.msra.mxu0 %v1137
    %1139 = vmatprep.subr.mxu0 0.0
    %1140 = vmatpush2.msra.mxu0 0.0
    %1141 = vmatprep.subr.mxu0 0.0
    %1142 = vmatpush2.msra.mxu0 0.0
    %1143 = vmatprep.subr.mxu0 0.0
    %1144 = vmatpush2.msra.mxu0 0.0
    %1145 = vmatprep.subr.mxu0 0.0
    %1146 = vmatpush2.msra.mxu0 0.0
    %1147 = vmatprep.subr.mxu0 0.0
    %1148 = vmatpush2.msra.mxu0 0.0
    %1149 = vmatprep.subr.mxu0 0.0
    %1150 = vmatpush2.msra.mxu0 0.0
    %1151 = vmatprep.subr.mxu0 0.0
    %1152 = vmatpush2.msra.mxu0 0.0
    %1153 = vmatprep.subr.mxu0 0.0
    %1154 = vmatpush2.msra.mxu0 0.0
    %1155 = vmatprep.subr.mxu0 0.0
    %1156 = vmatpush2.msra.mxu0 0.0
    %1157 = vmatprep.subr.mxu0 0.0
    %1158 = vmatpush2.msra.mxu0 0.0
    %1159 = vmatprep.subr.mxu0 0.0
    %1160 = vmatpush2.msra.mxu0 0.0
    %1161 = vmatprep.subr.mxu0 0.0
    %1162 = vmatpush2.msra.mxu0 0.0
    %1163 = vmatprep.subr.mxu0 0.0
    %1164 = vmatpush2.msra.mxu0 0.0
    %1165 = vmatprep.subr.mxu0 0.0
    %1166 = vmatpush2.msra.mxu0 0.0
    %1167 = vmatprep.subr.mxu0 0.0
    %1168 = vmatpush2.msra.mxu0 0.0
    %1169 = vmatprep.subr.mxu0 0.0
    %1170 = vmatpush2.msra.mxu0 0.0
    %1171 = vmatprep.mubr.f32.mxu0 0.0
    %v1172 = vand.u32 %v726, 4294901760
    %v1173 = vsub.f32 %v726, %v1172
    %v1174 = vand.u32 %v1173, 4294901760
    %1175 = vmatmul.mubr.f32.gmra.mxu0 %v1174
    %v1176 = vpop.f32.mrf.mxu0
    %v1177 = vadd.f32 %v1088, %v1176
    %v1178 = vpop.f32.mrf.mxu0
    %1179 = vdwg.mxu0
    %1180 = vmatprep.subr.mxu0 0.0
    %v1181 = vand.u32 %v744, 4294901760
    %v1182 = vsub.f32 %v744, %v1181
    %v1183 = vand.u32 %v1182, 4294901760
    %1184 = vmatpush1.msra.mxu0 %v1183
    %1185 = vmatprep.subr.mxu0 0.0
    %v1186 = vand.u32 %v743, 4294901760
    %v1187 = vsub.f32 %v743, %v1186
    %v1188 = vand.u32 %v1187, 4294901760
    %1189 = vmatpush1.msra.mxu0 %v1188
    %1190 = vmatprep.subr.mxu0 0.0
    %v1191 = vand.u32 %v742, 4294901760
    %v1192 = vsub.f32 %v742, %v1191
    %v1193 = vand.u32 %v1192, 4294901760
    %1194 = vmatpush1.msra.mxu0 %v1193
    %1195 = vmatprep.subr.mxu0 0.0
    %v1196 = vand.u32 %v741, 4294901760
    %v1197 = vsub.f32 %v741, %v1196
    %v1198 = vand.u32 %v1197, 4294901760
    %1199 = vmatpush1.msra.mxu0 %v1198
    %1200 = vmatprep.subr.mxu0 0.0
    %v1201 = vand.u32 %v740, 4294901760
    %v1202 = vsub.f32 %v740, %v1201
    %v1203 = vand.u32 %v1202, 4294901760
    %1204 = vmatpush1.msra.mxu0 %v1203
    %1205 = vmatprep.subr.mxu0 0.0
    %v1206 = vand.u32 %v739, 4294901760
    %v1207 = vsub.f32 %v739, %v1206
    %v1208 = vand.u32 %v1207, 4294901760
    %1209 = vmatpush1.msra.mxu0 %v1208
    %1210 = vmatprep.subr.mxu0 0.0
    %v1211 = vand.u32 %v738, 4294901760
    %v1212 = vsub.f32 %v738, %v1211
    %v1213 = vand.u32 %v1212, 4294901760
    %1214 = vmatpush1.msra.mxu0 %v1213
    %1215 = vmatprep.subr.mxu0 0.0
    %v1216 = vand.u32 %v737, 4294901760
    %v1217 = vsub.f32 %v737, %v1216
    %v1218 = vand.u32 %v1217, 4294901760
    %1219 = vmatpush1.msra.mxu0 %v1218
    %1220 = vmatprep.subr.mxu0 0.0
    %v1221 = vand.u32 %v736, 4294901760
    %v1222 = vsub.f32 %v736, %v1221
    %v1223 = vand.u32 %v1222, 4294901760
    %1224 = vmatpush1.msra.mxu0 %v1223
    %1225 = vmatprep.subr.mxu0 0.0
    %v1226 = vand.u32 %v735, 4294901760
    %v1227 = vsub.f32 %v735, %v1226
    %v1228 = vand.u32 %v1227, 4294901760
    %1229 = vmatpush1.msra.mxu0 %v1228
    %1230 = vmatprep.subr.mxu0 0.0
    %v1231 = vand.u32 %v734, 4294901760
    %v1232 = vsub.f32 %v734, %v1231
    %v1233 = vand.u32 %v1232, 4294901760
    %1234 = vmatpush1.msra.mxu0 %v1233
    %1235 = vmatprep.subr.mxu0 0.0
    %v1236 = vand.u32 %v733, 4294901760
    %v1237 = vsub.f32 %v733, %v1236
    %v1238 = vand.u32 %v1237, 4294901760
    %1239 = vmatpush1.msra.mxu0 %v1238
    %1240 = vmatprep.subr.mxu0 0.0
    %v1241 = vand.u32 %v732, 4294901760
    %v1242 = vsub.f32 %v732, %v1241
    %v1243 = vand.u32 %v1242, 4294901760
    %1244 = vmatpush1.msra.mxu0 %v1243
    %1245 = vmatprep.subr.mxu0 0.0
    %v1246 = vand.u32 %v731, 4294901760
    %v1247 = vsub.f32 %v731, %v1246
    %v1248 = vand.u32 %v1247, 4294901760
    %1249 = vmatpush1.msra.mxu0 %v1248
    %1250 = vmatprep.subr.mxu0 0.0
    %v1251 = vand.u32 %v730, 4294901760
    %v1252 = vsub.f32 %v730, %v1251
    %v1253 = vand.u32 %v1252, 4294901760
    %1254 = vmatpush1.msra.mxu0 %v1253
    %1255 = vmatprep.subr.mxu0 0.0
    %v1256 = vand.u32 %v729, 4294901760
    %v1257 = vsub.f32 %v729, %v1256
    %v1258 = vand.u32 %v1257, 4294901760
    %1259 = vmatpush1.msra.mxu0 %v1258
    %1260 = vmatprep.subr.mxu0 0.0
    %1261 = vmatpush2.msra.mxu0 0.0
    %1262 = vmatprep.subr.mxu0 0.0
    %1263 = vmatpush2.msra.mxu0 0.0
    %1264 = vmatprep.subr.mxu0 0.0
    %1265 = vmatpush2.msra.mxu0 0.0
    %1266 = vmatprep.subr.mxu0 0.0
    %1267 = vmatpush2.msra.mxu0 0.0
    %1268 = vmatprep.subr.mxu0 0.0
    %1269 = vmatpush2.msra.mxu0 0.0
    %1270 = vmatprep.subr.mxu0 0.0
    %1271 = vmatpush2.msra.mxu0 0.0
    %1272 = vmatprep.subr.mxu0 0.0
    %1273 = vmatpush2.msra.mxu0 0.0
    %1274 = vmatprep.subr.mxu0 0.0
    %1275 = vmatpush2.msra.mxu0 0.0
    %1276 = vmatprep.subr.mxu0 0.0
    %1277 = vmatpush2.msra.mxu0 0.0
    %1278 = vmatprep.subr.mxu0 0.0
    %1279 = vmatpush2.msra.mxu0 0.0
    %1280 = vmatprep.subr.mxu0 0.0
    %1281 = vmatpush2.msra.mxu0 0.0
    %1282 = vmatprep.subr.mxu0 0.0
    %1283 = vmatpush2.msra.mxu0 0.0
    %1284 = vmatprep.subr.mxu0 0.0
    %1285 = vmatpush2.msra.mxu0 0.0
    %1286 = vmatprep.subr.mxu0 0.0
    %1287 = vmatpush2.msra.mxu0 0.0
    %1288 = vmatprep.subr.mxu0 0.0
    %1289 = vmatpush2.msra.mxu0 0.0
    %1290 = vmatprep.subr.mxu0 0.0
    %1291 = vmatpush2.msra.mxu0 0.0
    %1292 = vmatprep.mubr.f32.mxu0 0.0
    %v1293 = vand.u32 %v726, 4294901760
    %1294 = vmatmul.mubr.f32.gmra.mxu0 %v1293
    %v1295 = vpop.f32.mrf.mxu0
    %v1296 = vadd.f32 %v1177, %v1295
    %v1297 = vpop.f32.mrf.mxu0
    %1298 = vdwg.mxu0
    %1299 = vmatprep.subr.mxu0 0.0
    %v1300 = vand.u32 %v744, 4294901760
    %1301 = vmatpush1.msra.mxu0 %v1300
    %1302 = vmatprep.subr.mxu0 0.0
    %v1303 = vand.u32 %v743, 4294901760
    %1304 = vmatpush1.msra.mxu0 %v1303
    %1305 = vmatprep.subr.mxu0 0.0
    %v1306 = vand.u32 %v742, 4294901760
    %1307 = vmatpush1.msra.mxu0 %v1306
    %1308 = vmatprep.subr.mxu0 0.0
    %v1309 = vand.u32 %v741, 4294901760
    %1310 = vmatpush1.msra.mxu0 %v1309
    %1311 = vmatprep.subr.mxu0 0.0
    %v1312 = vand.u32 %v740, 4294901760
    %1313 = vmatpush1.msra.mxu0 %v1312
    %1314 = vmatprep.subr.mxu0 0.0
    %v1315 = vand.u32 %v739, 4294901760
    %1316 = vmatpush1.msra.mxu0 %v1315
    %1317 = vmatprep.subr.mxu0 0.0
    %v1318 = vand.u32 %v738, 4294901760
    %1319 = vmatpush1.msra.mxu0 %v1318
    %1320 = vmatprep.subr.mxu0 0.0
    %v1321 = vand.u32 %v737, 4294901760
    %1322 = vmatpush1.msra.mxu0 %v1321
    %1323 = vmatprep.subr.mxu0 0.0
    %v1324 = vand.u32 %v736, 4294901760
    %1325 = vmatpush1.msra.mxu0 %v1324
    %1326 = vmatprep.subr.mxu0 0.0
    %v1327 = vand.u32 %v735, 4294901760
    %1328 = vmatpush1.msra.mxu0 %v1327
    %1329 = vmatprep.subr.mxu0 0.0
    %v1330 = vand.u32 %v734, 4294901760
    %1331 = vmatpush1.msra.mxu0 %v1330
    %1332 = vmatprep.subr.mxu0 0.0
    %v1333 = vand.u32 %v733, 4294901760
    %1334 = vmatpush1.msra.mxu0 %v1333
    %1335 = vmatprep.subr.mxu0 0.0
    %v1336 = vand.u32 %v732, 4294901760
    %1337 = vmatpush1.msra.mxu0 %v1336
    %1338 = vmatprep.subr.mxu0 0.0
    %v1339 = vand.u32 %v731, 4294901760
    %1340 = vmatpush1.msra.mxu0 %v1339
    %1341 = vmatprep.subr.mxu0 0.0
    %v1342 = vand.u32 %v730, 4294901760
    %1343 = vmatpush1.msra.mxu0 %v1342
    %1344 = vmatprep.subr.mxu0 0.0
    %v1345 = vand.u32 %v729, 4294901760
    %1346 = vmatpush1.msra.mxu0 %v1345
    %1347 = vmatprep.subr.mxu0 0.0
    %1348 = vmatpush2.msra.mxu0 0.0
    %1349 = vmatprep.subr.mxu0 0.0
    %1350 = vmatpush2.msra.mxu0 0.0
    %1351 = vmatprep.subr.mxu0 0.0
    %1352 = vmatpush2.msra.mxu0 0.0
    %1353 = vmatprep.subr.mxu0 0.0
    %1354 = vmatpush2.msra.mxu0 0.0
    %1355 = vmatprep.subr.mxu0 0.0
    %1356 = vmatpush2.msra.mxu0 0.0
    %1357 = vmatprep.subr.mxu0 0.0
    %1358 = vmatpush2.msra.mxu0 0.0
    %1359 = vmatprep.subr.mxu0 0.0
    %1360 = vmatpush2.msra.mxu0 0.0
    %1361 = vmatprep.subr.mxu0 0.0
    %1362 = vmatpush2.msra.mxu0 0.0
    %1363 = vmatprep.subr.mxu0 0.0
    %1364 = vmatpush2.msra.mxu0 0.0
    %1365 = vmatprep.subr.mxu0 0.0
    %1366 = vmatpush2.msra.mxu0 0.0
    %1367 = vmatprep.subr.mxu0 0.0
    %1368 = vmatpush2.msra.mxu0 0.0
    %1369 = vmatprep.subr.mxu0 0.0
    %1370 = vmatpush2.msra.mxu0 0.0
    %1371 = vmatprep.subr.mxu0 0.0
    %1372 = vmatpush2.msra.mxu0 0.0
    %1373 = vmatprep.subr.mxu0 0.0
    %1374 = vmatpush2.msra.mxu0 0.0
    %1375 = vmatprep.subr.mxu0 0.0
    %1376 = vmatpush2.msra.mxu0 0.0
    %1377 = vmatprep.subr.mxu0 0.0
    %1378 = vmatpush2.msra.mxu0 0.0
    %1379 = vmatprep.mubr.f32.mxu0 0.0
    %v1380 = vand.u32 %v726, 4294901760
    %1381 = vmatmul.mubr.f32.gmra.mxu0 %v1380
    %v1382 = vpop.f32.mrf.mxu0
    %v1383 = vadd.f32 %v1296, %v1382
    %v1384 = vpop.f32.mrf.mxu0
    %1385 = vdwg.mxu0
    %v1386 = vadd.f32 %v70, %v1383
    %1387 = vst [vmem:[#allocation10] sm:$0xff] %v1386
    // Predicated region
    $region34: #{tpu_custom_call.1} parent=1 // pred_check
      _
    $region35: #{tpu_custom_call.1} parent=1 // pred_check_branch
      %1389 = sbr.rel (0) target = $region37
    $region36: #{tpu_custom_call.1} parent=1 // pred_region
      %s1391 = ssub.s32 128, 128
      %1392 = vsyncadd [#allocation4], %s1391
      %s1394 = sshll.u32 [#allocation10], 4
      %s1395 = int_to_ptr.vmem [resolvable:$true] %s1394
      %1397 = dma.vmem_to_hbm [thread:$0]  %s1395, 128, %s4, [#allocation4]
    $region37: #{tpu_custom_call.1} parent=1 // pred_fallthru
      _
    // Predicated region
    $region38: #{tpu_custom_call.1} parent=1 // pred_check
      _
    $region39: #{tpu_custom_call.1} parent=1 // pred_check_branch
      %1399 = sbr.rel (0) target = $region41
    $region40: #{tpu_custom_call.1} parent=1 // pred_region
      %1400 = dma.done [#allocation4], 128
    $region41: #{tpu_custom_call.1} parent=1 // pred_fallthru
      _
    %1401 = vsyncpa [#allocation3], 1
    %1402 = vsyncpa [#allocation6], 1
    %1403 = vsyncpa [#allocation9], 1
    %1404 = vsyncpa [#allocation4], 1

// kernel: tpu_custom_call.1
$region0: #{tpu_custom_call.1}
  #allocation0 [shape = 'u32[]', space=smem, size = 0x4, offset = 0x4, fixed_abs, tag = 'smem constant byte address 0x4 - core index']
  #allocation1 [shape = 'u32[144,128]{1,0:T(1,128)}', space=vmem, size = 0x12000, scoped, tag = 'internal scratch']
  %s0 = inlined_call_operand.hbm [shape: f32[8,128], index: 0, kind: input, shape index: {}]
  %s1 = inlined_call_operand.hbm [shape: f32[8,128], index: 1, kind: input, shape index: {}]
  %s2 = inlined_call_operand.hbm [shape: f32[128,128], index: 2, kind: input, shape index: {}]
  %s3 = inlined_call_operand.hbm [shape: f32[128,128], index: 3, kind: input, shape index: {}]
  %s4 = inlined_call_operand.hbm [shape: f32[8,128], index: 4, kind: output, shape index: {}]
  %s5 = sld [smem:[#allocation0]]
  $region42: #{tpu_custom_call.1} parent=0
    _
  %s7 = ssub.s32 1, %s5
  %s8 = scalar_select 0, %s7, %s5
  $region1: #{tpu_custom_call.1} parent=0
    #allocation2 [shape = 'u8[4096]{0}', space=vmem, size = 0x1000, scoped, tag = 'input window, operand 0, single buffered']
    #allocation3 [shape = 's32[1]{0}', space=sflag, size = 0x4, scoped, tag = 'scoped memory for tpu_custom_call.1']
    #allocation4 [shape = 's32[1]{0}', space=sflag, size = 0x4, scoped, tag = 'scoped memory for tpu_custom_call.1']
    #allocation5 [shape = 'u8[4096]{0}', space=vmem, size = 0x1000, scoped, tag = 'input window, operand 1, single buffered']
    #allocation6 [shape = 's32[1]{0}', space=sflag, size = 0x4, scoped, tag = 'scoped memory for tpu_custom_call.1']
    #allocation7 [shape = 'u8[65536]{0}', space=vmem, size = 0x10000, scoped, tag = 'input window, operand 2, single buffered']
    #allocation8 [shape = 'u8[65536]{0}', space=vmem, size = 0x10000, scoped, tag = 'input window, operand 3, single buffered']
    #allocation9 [shape = 's32[1]{0}', space=sflag, size = 0x4, scoped, tag = 'scoped memory for tpu_custom_call.1']
    #allocation10 [shape = 'u8[4096]{0}', space=vmem, size = 0x1000, scoped, tag = 'output window, operand 0, single buffered']
    %9 = vsyncpa [#allocation3], 0
    %10 = vsyncpa [#allocation6], 0
    %11 = vsyncpa [#allocation9], 0
    %12 = vsyncpa [#allocation4], 0
    // Predicated region
    $region2: #{tpu_custom_call.1} parent=1 // pred_check
      _
    $region3: #{tpu_custom_call.1} parent=1 // pred_check_branch
      %14 = sbr.rel (0) target = $region5
    $region4: #{tpu_custom_call.1} parent=1 // pred_region
      %s16 = ssub.s32 128, 128
      %17 = vsyncadd [#allocation3], %s16
      %s19 = sshll.u32 [#allocation2], 4
      %s20 = int_to_ptr.vmem [resolvable:$true] %s19
      %22 = dma.hbm_to_vmem [thread:$0]  %s0, 128, %s20, [#allocation3]
    $region5: #{tpu_custom_call.1} parent=1 // pred_fallthru
      _
    // Predicated region
    $region6: #{tpu_custom_call.1} parent=1 // pred_check
      _
    $region7: #{tpu_custom_call.1} parent=1 // pred_check_branch
      %24 = sbr.rel (0) target = $region9
    $region8: #{tpu_custom_call.1} parent=1 // pred_region
      %s26 = ssub.s32 128, 128
      %27 = vsyncadd [#allocation6], %s26
      %s29 = sshll.u32 [#allocation5], 4
      %s30 = int_to_ptr.vmem [resolvable:$true] %s29
      %32 = dma.hbm_to_vmem [thread:$0]  %s1, 128, %s30, [#allocation6]
    $region9: #{tpu_custom_call.1} parent=1 // pred_fallthru
      _
    // Predicated region
    $region10: #{tpu_custom_call.1} parent=1 // pred_check
      _
    $region11: #{tpu_custom_call.1} parent=1 // pred_check_branch
      %34 = sbr.rel (0) target = $region13
    $region12: #{tpu_custom_call.1} parent=1 // pred_region
      %s36 = ssub.s32 2048, 2048
      %37 = vsyncadd [#allocation6], %s36
      %s38 = sshll.u32 [#allocation7], 4
      %s39 = int_to_ptr.vmem [resolvable:$true] %s38
      %44 = dma.hbm_to_vmem [thread:$0]  %s2, 2048, %s39, [#allocation6], 128, 128, 8
    $region13: #{tpu_custom_call.1} parent=1 // pred_fallthru
      _
    // Predicated region
    $region14: #{tpu_custom_call.1} parent=1 // pred_check
      _
    $region15: #{tpu_custom_call.1} parent=1 // pred_check_branch
      %46 = sbr.rel (0) target = $region17
    $region16: #{tpu_custom_call.1} parent=1 // pred_region
      %s48 = ssub.s32 2048, 2048
      %49 = vsyncadd [#allocation9], %s48
      %s50 = sshll.u32 [#allocation8], 4
      %s51 = int_to_ptr.vmem [resolvable:$true] %s50
      %56 = dma.hbm_to_vmem [thread:$0]  %s3, 2048, %s51, [#allocation9], 128, 128, 8
    $region17: #{tpu_custom_call.1} parent=1 // pred_fallthru
      _
    // Predicated region
    $region18: #{tpu_custom_call.1} parent=1 // pred_check
      _
    $region19: #{tpu_custom_call.1} parent=1 // pred_check_branch
      %58 = sbr.rel (0) target = $region21
    $region20: #{tpu_custom_call.1} parent=1 // pred_region
      %59 = dma.done [#allocation3], 128
    $region21: #{tpu_custom_call.1} parent=1 // pred_fallthru
      _
    // Predicated region
    $region22: #{tpu_custom_call.1} parent=1 // pred_check
      _
    $region23: #{tpu_custom_call.1} parent=1 // pred_check_branch
      %61 = sbr.rel (0) target = $region25
    $region24: #{tpu_custom_call.1} parent=1 // pred_region
      %62 = dma.done [#allocation6], 128
    $region25: #{tpu_custom_call.1} parent=1 // pred_fallthru
      _
    // Predicated region
    $region26: #{tpu_custom_call.1} parent=1 // pred_check
      _
    $region27: #{tpu_custom_call.1} parent=1 // pred_check_branch
      %64 = sbr.rel (0) target = $region29
    $region28: #{tpu_custom_call.1} parent=1 // pred_region
      %65 = dma.done [#allocation6], 2048
    $region29: #{tpu_custom_call.1} parent=1 // pred_fallthru
      _
    // Predicated region
    $region30: #{tpu_custom_call.1} parent=1 // pred_check
      _
    $region31: #{tpu_custom_call.1} parent=1 // pred_check_branch
      %67 = sbr.rel (0) target = $region33
    $region32: #{tpu_custom_call.1} parent=1 // pred_region
      %68 = dma.done [#allocation9], 2048
    $region33: #{tpu_custom_call.1} parent=1 // pred_fallthru
      _
    %v69 = vld [vmem:[#allocation5] sm:$0xff]
    %v70 = vld [vmem:[#allocation2] sm:$0xff]
    %v71 = vsub.f32 %v69, %v70
    %v72 = vld [vmem:[#allocation7] sm:$0xff]
    %v73 = vld [vmem:[#allocation7 + $0x8] sm:$0xff]
    %v74 = vld [vmem:[#allocation7 + $0x10] sm:$0xff]
    %v75 = vld [vmem:[#allocation7 + $0x18] sm:$0xff]
    %v76 = vld [vmem:[#allocation7 + $0x20] sm:$0xff]
    %v77 = vld [vmem:[#allocation7 + $0x28] sm:$0xff]
    %v78 = vld [vmem:[#allocation7 + $0x30] sm:$0xff]
    %v79 = vld [vmem:[#allocation7 + $0x38] sm:$0xff]
    %v80 = vld [vmem:[#allocation7 + $0x40] sm:$0xff]
    %v81 = vld [vmem:[#allocation7 + $0x48] sm:$0xff]
    %v82 = vld [vmem:[#allocation7 + $0x50] sm:$0xff]
    %v83 = vld [vmem:[#allocation7 + $0x58] sm:$0xff]
    %v84 = vld [vmem:[#allocation7 + $0x60] sm:$0xff]
    %v85 = vld [vmem:[#allocation7 + $0x68] sm:$0xff]
    %v86 = vld [vmem:[#allocation7 + $0x70] sm:$0xff]
    %v87 = vld [vmem:[#allocation7 + $0x78] sm:$0xff]
    %88 = vmatprep.subr.mxu0 0.0
    %v89 = vand.u32 %v87, 4294901760
    %90 = vmatpush1.msra.mxu0 %v89
    %91 = vmatprep.subr.mxu0 0.0
    %v92 = vand.u32 %v86, 4294901760
    %93 = vmatpush1.msra.mxu0 %v92
    %94 = vmatprep.subr.mxu0 0.0
    %v95 = vand.u32 %v85, 4294901760
    %96 = vmatpush1.msra.mxu0 %v95
    %97 = vmatprep.subr.mxu0 0.0
    %v98 = vand.u32 %v84, 4294901760
    %99 = vmatpush1.msra.mxu0 %v98
    %100 = vmatprep.subr.mxu0 0.0
    %v101 = vand.u32 %v83, 4294901760
    %102 = vmatpush1.msra.mxu0 %v101
    %103 = vmatprep.subr.mxu0 0.0
    %v104 = vand.u32 %v82, 4294901760
    %105 = vmatpush1.msra.mxu0 %v104
    %106 = vmatprep.subr.mxu0 0.0
    %v107 = vand.u32 %v81, 4294901760
    %108 = vmatpush1.msra.mxu0 %v107
    %109 = vmatprep.subr.mxu0 0.0
    %v110 = vand.u32 %v80, 4294901760
    %111 = vmatpush1.msra.mxu0 %v110
    %112 = vmatprep.subr.mxu0 0.0
    %v113 = vand.u32 %v79, 4294901760
    %114 = vmatpush1.msra.mxu0 %v113
    %115 = vmatprep.subr.mxu0 0.0
    %v116 = vand.u32 %v78, 4294901760
    %117 = vmatpush1.msra.mxu0 %v116
    %118 = vmatprep.subr.mxu0 0.0
    %v119 = vand.u32 %v77, 4294901760
    %120 = vmatpush1.msra.mxu0 %v119
    %121 = vmatprep.subr.mxu0 0.0
    %v122 = vand.u32 %v76, 4294901760
    %123 = vmatpush1.msra.mxu0 %v122
    %124 = vmatprep.subr.mxu0 0.0
    %v125 = vand.u32 %v75, 4294901760
    %126 = vmatpush1.msra.mxu0 %v125
    %127 = vmatprep.subr.mxu0 0.0
    %v128 = vand.u32 %v74, 4294901760
    %129 = vmatpush1.msra.mxu0 %v128
    %130 = vmatprep.subr.mxu0 0.0
    %v131 = vand.u32 %v73, 4294901760
    %132 = vmatpush1.msra.mxu0 %v131
    %133 = vmatprep.subr.mxu0 0.0
    %v134 = vand.u32 %v72, 4294901760
    %135 = vmatpush1.msra.mxu0 %v134
    %136 = vmatprep.subr.mxu0 0.0
    %137 = vmatpush2.msra.mxu0 0.0
    %138 = vmatprep.subr.mxu0 0.0
    %139 = vmatpush2.msra.mxu0 0.0
    %140 = vmatprep.subr.mxu0 0.0
    %141 = vmatpush2.msra.mxu0 0.0
    %142 = vmatprep.subr.mxu0 0.0
    %143 = vmatpush2.msra.mxu0 0.0
    %144 = vmatprep.subr.mxu0 0.0
    %145 = vmatpush2.msra.mxu0 0.0
    %146 = vmatprep.subr.mxu0 0.0
    %147 = vmatpush2.msra.mxu0 0.0
    %148 = vmatprep.subr.mxu0 0.0
    %149 = vmatpush2.msra.mxu0 0.0
    %150 = vmatprep.subr.mxu0 0.0
    %151 = vmatpush2.msra.mxu0 0.0
    %152 = vmatprep.subr.mxu0 0.0
    %153 = vmatpush2.msra.mxu0 0.0
    %154 = vmatprep.subr.mxu0 0.0
    %155 = vmatpush2.msra.mxu0 0.0
    %156 = vmatprep.subr.mxu0 0.0
    %157 = vmatpush2.msra.mxu0 0.0
    %158 = vmatprep.subr.mxu0 0.0
    %159 = vmatpush2.msra.mxu0 0.0
    %160 = vmatprep.subr.mxu0 0.0
    %161 = vmatpush2.msra.mxu0 0.0
    %162 = vmatprep.subr.mxu0 0.0
    %163 = vmatpush2.msra.mxu0 0.0
    %164 = vmatprep.subr.mxu0 0.0
    %165 = vmatpush2.msra.mxu0 0.0
    %166 = vmatprep.subr.mxu0 0.0
    %167 = vmatpush2.msra.mxu0 0.0
    %168 = vmatprep.mubr.f32.mxu0 0.0
    %v169 = vand.u32 %v71, 4294901760
    %v170 = vsub.f32 %v71, %v169
    %v171 = vand.u32 %v170, 4294901760
    %v172 = vsub.f32 %v170, %v171
    %v173 = vand.u32 %v172, 4294901760
    %174 = vmatmul.mubr.f32.gmra.mxu0 %v173
    %v175 = vpop.f32.mrf.mxu0
    %v176 = vadd.f32 0.0, %v175
    %v177 = vpop.f32.mrf.mxu0
    %178 = vdwg.mxu0
    %179 = vmatprep.subr.mxu0 0.0
    %v180 = vand.u32 %v87, 4294901760
    %v181 = vsub.f32 %v87, %v180
    %v182 = vand.u32 %v181, 4294901760
    %v183 = vsub.f32 %v181, %v182
    %v184 = vand.u32 %v183, 4294901760
    %185 = vmatpush1.msra.mxu0 %v184
    %186 = vmatprep.subr.mxu0 0.0
    %v187 = vand.u32 %v86, 4294901760
    %v188 = vsub.f32 %v86, %v187
    %v189 = vand.u32 %v188, 4294901760
    %v190 = vsub.f32 %v188, %v189
    %v191 = vand.u32 %v190, 4294901760
    %192 = vmatpush1.msra.mxu0 %v191
    %193 = vmatprep.subr.mxu0 0.0
    %v194 = vand.u32 %v85, 4294901760
    %v195 = vsub.f32 %v85, %v194
    %v196 = vand.u32 %v195, 4294901760
    %v197 = vsub.f32 %v195, %v196
    %v198 = vand.u32 %v197, 4294901760
    %199 = vmatpush1.msra.mxu0 %v198
    %200 = vmatprep.subr.mxu0 0.0
    %v201 = vand.u32 %v84, 4294901760
    %v202 = vsub.f32 %v84, %v201
    %v203 = vand.u32 %v202, 4294901760
    %v204 = vsub.f32 %v202, %v203
    %v205 = vand.u32 %v204, 4294901760
    %206 = vmatpush1.msra.mxu0 %v205
    %207 = vmatprep.subr.mxu0 0.0
    %v208 = vand.u32 %v83, 4294901760
    %v209 = vsub.f32 %v83, %v208
    %v210 = vand.u32 %v209, 4294901760
    %v211 = vsub.f32 %v209, %v210
    %v212 = vand.u32 %v211, 4294901760
    %213 = vmatpush1.msra.mxu0 %v212
    %214 = vmatprep.subr.mxu0 0.0
    %v215 = vand.u32 %v82, 4294901760
    %v216 = vsub.f32 %v82, %v215
    %v217 = vand.u32 %v216, 4294901760
    %v218 = vsub.f32 %v216, %v217
    %v219 = vand.u32 %v218, 4294901760
    %220 = vmatpush1.msra.mxu0 %v219
    %221 = vmatprep.subr.mxu0 0.0
    %v222 = vand.u32 %v81, 4294901760
    %v223 = vsub.f32 %v81, %v222
    %v224 = vand.u32 %v223, 4294901760
    %v225 = vsub.f32 %v223, %v224
    %v226 = vand.u32 %v225, 4294901760
    %227 = vmatpush1.msra.mxu0 %v226
    %228 = vmatprep.subr.mxu0 0.0
    %v229 = vand.u32 %v80, 4294901760
    %v230 = vsub.f32 %v80, %v229
    %v231 = vand.u32 %v230, 4294901760
    %v232 = vsub.f32 %v230, %v231
    %v233 = vand.u32 %v232, 4294901760
    %234 = vmatpush1.msra.mxu0 %v233
    %235 = vmatprep.subr.mxu0 0.0
    %v236 = vand.u32 %v79, 4294901760
    %v237 = vsub.f32 %v79, %v236
    %v238 = vand.u32 %v237, 4294901760
    %v239 = vsub.f32 %v237, %v238
    %v240 = vand.u32 %v239, 4294901760
    %241 = vmatpush1.msra.mxu0 %v240
    %242 = vmatprep.subr.mxu0 0.0
    %v243 = vand.u32 %v78, 4294901760
    %v244 = vsub.f32 %v78, %v243
    %v245 = vand.u32 %v244, 4294901760
    %v246 = vsub.f32 %v244, %v245
    %v247 = vand.u32 %v246, 4294901760
    %248 = vmatpush1.msra.mxu0 %v247
    %249 = vmatprep.subr.mxu0 0.0
    %v250 = vand.u32 %v77, 4294901760
    %v251 = vsub.f32 %v77, %v250
    %v252 = vand.u32 %v251, 4294901760
    %v253 = vsub.f32 %v251, %v252
    %v254 = vand.u32 %v253, 4294901760
    %255 = vmatpush1.msra.mxu0 %v254
    %256 = vmatprep.subr.mxu0 0.0
    %v257 = vand.u32 %v76, 4294901760
    %v258 = vsub.f32 %v76, %v257
    %v259 = vand.u32 %v258, 4294901760
    %v260 = vsub.f32 %v258, %v259
    %v261 = vand.u32 %v260, 4294901760
    %262 = vmatpush1.msra.mxu0 %v261
    %263 = vmatprep.subr.mxu0 0.0
    %v264 = vand.u32 %v75, 4294901760
    %v265 = vsub.f32 %v75, %v264
    %v266 = vand.u32 %v265, 4294901760
    %v267 = vsub.f32 %v265, %v266
    %v268 = vand.u32 %v267, 4294901760
    %269 = vmatpush1.msra.mxu0 %v268
    %270 = vmatprep.subr.mxu0 0.0
    %v271 = vand.u32 %v74, 4294901760
    %v272 = vsub.f32 %v74, %v271
    %v273 = vand.u32 %v272, 4294901760
    %v274 = vsub.f32 %v272, %v273
    %v275 = vand.u32 %v274, 4294901760
    %276 = vmatpush1.msra.mxu0 %v275
    %277 = vmatprep.subr.mxu0 0.0
    %v278 = vand.u32 %v73, 4294901760
    %v279 = vsub.f32 %v73, %v278
    %v280 = vand.u32 %v279, 4294901760
    %v281 = vsub.f32 %v279, %v280
    %v282 = vand.u32 %v281, 4294901760
    %283 = vmatpush1.msra.mxu0 %v282
    %284 = vmatprep.subr.mxu0 0.0
    %v285 = vand.u32 %v72, 4294901760
    %v286 = vsub.f32 %v72, %v285
    %v287 = vand.u32 %v286, 4294901760
    %v288 = vsub.f32 %v286, %v287
    %v289 = vand.u32 %v288, 4294901760
    %290 = vmatpush1.msra.mxu0 %v289
    %291 = vmatprep.subr.mxu0 0.0
    %292 = vmatpush2.msra.mxu0 0.0
    %293 = vmatprep.subr.mxu0 0.0
    %294 = vmatpush2.msra.mxu0 0.0
    %295 = vmatprep.subr.mxu0 0.0
    %296 = vmatpush2.msra.mxu0 0.0
    %297 = vmatprep.subr.mxu0 0.0
    %298 = vmatpush2.msra.mxu0 0.0
    %299 = vmatprep.subr.mxu0 0.0
    %300 = vmatpush2.msra.mxu0 0.0
    %301 = vmatprep.subr.mxu0 0.0
    %302 = vmatpush2.msra.mxu0 0.0
    %303 = vmatprep.subr.mxu0 0.0
    %304 = vmatpush2.msra.mxu0 0.0
    %305 = vmatprep.subr.mxu0 0.0
    %306 = vmatpush2.msra.mxu0 0.0
    %307 = vmatprep.subr.mxu0 0.0
    %308 = vmatpush2.msra.mxu0 0.0
    %309 = vmatprep.subr.mxu0 0.0
    %310 = vmatpush2.msra.mxu0 0.0
    %311 = vmatprep.subr.mxu0 0.0
    %312 = vmatpush2.msra.mxu0 0.0
    %313 = vmatprep.subr.mxu0 0.0
    %314 = vmatpush2.msra.mxu0 0.0
    %315 = vmatprep.subr.mxu0 0.0
    %316 = vmatpush2.msra.mxu0 0.0
    %317 = vmatprep.subr.mxu0 0.0
    %318 = vmatpush2.msra.mxu0 0.0
    %319 = vmatprep.subr.mxu0 0.0
    %320 = vmatpush2.msra.mxu0 0.0
    %321 = vmatprep.subr.mxu0 0.0
    %322 = vmatpush2.msra.mxu0 0.0
    %323 = vmatprep.mubr.f32.mxu0 0.0
    %v324 = vand.u32 %v71, 4294901760
    %325 = vmatmul.mubr.f32.gmra.mxu0 %v324
    %v326 = vpop.f32.mrf.mxu0
    %v327 = vadd.f32 %v176, %v326
    %v328 = vpop.f32.mrf.mxu0
    %329 = vdwg.mxu0
    %330 = vmatprep.subr.mxu0 0.0
    %v331 = vand.u32 %v87, 4294901760
    %v332 = vsub.f32 %v87, %v331
    %333 = vmatpush1.msra.mxu0 %v332
    %334 = vmatprep.subr.mxu0 0.0
    %v335 = vand.u32 %v86, 4294901760
    %v336 = vsub.f32 %v86, %v335
    %337 = vmatpush1.msra.mxu0 %v336
    %338 = vmatprep.subr.mxu0 0.0
    %v339 = vand.u32 %v85, 4294901760
    %v340 = vsub.f32 %v85, %v339
    %341 = vmatpush1.msra.mxu0 %v340
    %342 = vmatprep.subr.mxu0 0.0
    %v343 = vand.u32 %v84, 4294901760
    %v344 = vsub.f32 %v84, %v343
    %345 = vmatpush1.msra.mxu0 %v344
    %346 = vmatprep.subr.mxu0 0.0
    %v347 = vand.u32 %v83, 4294901760
    %v348 = vsub.f32 %v83, %v347
    %349 = vmatpush1.msra.mxu0 %v348
    %350 = vmatprep.subr.mxu0 0.0
    %v351 = vand.u32 %v82, 4294901760
    %v352 = vsub.f32 %v82, %v351
    %353 = vmatpush1.msra.mxu0 %v352
    %354 = vmatprep.subr.mxu0 0.0
    %v355 = vand.u32 %v81, 4294901760
    %v356 = vsub.f32 %v81, %v355
    %357 = vmatpush1.msra.mxu0 %v356
    %358 = vmatprep.subr.mxu0 0.0
    %v359 = vand.u32 %v80, 4294901760
    %v360 = vsub.f32 %v80, %v359
    %361 = vmatpush1.msra.mxu0 %v360
    %362 = vmatprep.subr.mxu0 0.0
    %v363 = vand.u32 %v79, 4294901760
    %v364 = vsub.f32 %v79, %v363
    %365 = vmatpush1.msra.mxu0 %v364
    %366 = vmatprep.subr.mxu0 0.0
    %v367 = vand.u32 %v78, 4294901760
    %v368 = vsub.f32 %v78, %v367
    %369 = vmatpush1.msra.mxu0 %v368
    %370 = vmatprep.subr.mxu0 0.0
    %v371 = vand.u32 %v77, 4294901760
    %v372 = vsub.f32 %v77, %v371
    %373 = vmatpush1.msra.mxu0 %v372
    %374 = vmatprep.subr.mxu0 0.0
    %v375 = vand.u32 %v76, 4294901760
    %v376 = vsub.f32 %v76, %v375
    %377 = vmatpush1.msra.mxu0 %v376
    %378 = vmatprep.subr.mxu0 0.0
    %v379 = vand.u32 %v75, 4294901760
    %v380 = vsub.f32 %v75, %v379
    %381 = vmatpush1.msra.mxu0 %v380
    %382 = vmatprep.subr.mxu0 0.0
    %v383 = vand.u32 %v74, 4294901760
    %v384 = vsub.f32 %v74, %v383
    %385 = vmatpush1.msra.mxu0 %v384
    %386 = vmatprep.subr.mxu0 0.0
    %v387 = vand.u32 %v73, 4294901760
    %v388 = vsub.f32 %v73, %v387
    %389 = vmatpush1.msra.mxu0 %v388
    %390 = vmatprep.subr.mxu0 0.0
    %v391 = vand.u32 %v72, 4294901760
    %v392 = vsub.f32 %v72, %v391
    %393 = vmatpush1.msra.mxu0 %v392
    %394 = vmatprep.subr.mxu0 0.0
    %395 = vmatpush2.msra.mxu0 0.0
    %396 = vmatprep.subr.mxu0 0.0
    %397 = vmatpush2.msra.mxu0 0.0
    %398 = vmatprep.subr.mxu0 0.0
    %399 = vmatpush2.msra.mxu0 0.0
    %400 = vmatprep.subr.mxu0 0.0
    %401 = vmatpush2.msra.mxu0 0.0
    %402 = vmatprep.subr.mxu0 0.0
    %403 = vmatpush2.msra.mxu0 0.0
    %404 = vmatprep.subr.mxu0 0.0
    %405 = vmatpush2.msra.mxu0 0.0
    %406 = vmatprep.subr.mxu0 0.0
    %407 = vmatpush2.msra.mxu0 0.0
    %408 = vmatprep.subr.mxu0 0.0
    %409 = vmatpush2.msra.mxu0 0.0
    %410 = vmatprep.subr.mxu0 0.0
    %411 = vmatpush2.msra.mxu0 0.0
    %412 = vmatprep.subr.mxu0 0.0
    %413 = vmatpush2.msra.mxu0 0.0
    %414 = vmatprep.subr.mxu0 0.0
    %415 = vmatpush2.msra.mxu0 0.0
    %416 = vmatprep.subr.mxu0 0.0
    %417 = vmatpush2.msra.mxu0 0.0
    %418 = vmatprep.subr.mxu0 0.0
    %419 = vmatpush2.msra.mxu0 0.0
    %420 = vmatprep.subr.mxu0 0.0
    %421 = vmatpush2.msra.mxu0 0.0
    %422 = vmatprep.subr.mxu0 0.0
    %423 = vmatpush2.msra.mxu0 0.0
    %424 = vmatprep.subr.mxu0 0.0
    %425 = vmatpush2.msra.mxu0 0.0
    %426 = vmatprep.mubr.f32.mxu0 0.0
    %v427 = vand.u32 %v71, 4294901760
    %v428 = vsub.f32 %v71, %v427
    %429 = vmatmul.mubr.f32.gmra.mxu0 %v428
    %v430 = vpop.f32.mrf.mxu0
    %v431 = vadd.f32 %v327, %v430
    %v432 = vpop.f32.mrf.mxu0
    %433 = vdwg.mxu0
    %434 = vmatprep.subr.mxu0 0.0
    %v435 = vand.u32 %v87, 4294901760
    %436 = vmatpush1.msra.mxu0 %v435
    %437 = vmatprep.subr.mxu0 0.0
    %v438 = vand.u32 %v86, 4294901760
    %439 = vmatpush1.msra.mxu0 %v438
    %440 = vmatprep.subr.mxu0 0.0
    %v441 = vand.u32 %v85, 4294901760
    %442 = vmatpush1.msra.mxu0 %v441
    %443 = vmatprep.subr.mxu0 0.0
    %v444 = vand.u32 %v84, 4294901760
    %445 = vmatpush1.msra.mxu0 %v444
    %446 = vmatprep.subr.mxu0 0.0
    %v447 = vand.u32 %v83, 4294901760
    %448 = vmatpush1.msra.mxu0 %v447
    %449 = vmatprep.subr.mxu0 0.0
    %v450 = vand.u32 %v82, 4294901760
    %451 = vmatpush1.msra.mxu0 %v450
    %452 = vmatprep.subr.mxu0 0.0
    %v453 = vand.u32 %v81, 4294901760
    %454 = vmatpush1.msra.mxu0 %v453
    %455 = vmatprep.subr.mxu0 0.0
    %v456 = vand.u32 %v80, 4294901760
    %457 = vmatpush1.msra.mxu0 %v456
    %458 = vmatprep.subr.mxu0 0.0
    %v459 = vand.u32 %v79, 4294901760
    %460 = vmatpush1.msra.mxu0 %v459
    %461 = vmatprep.subr.mxu0 0.0
    %v462 = vand.u32 %v78, 4294901760
    %463 = vmatpush1.msra.mxu0 %v462
    %464 = vmatprep.subr.mxu0 0.0
    %v465 = vand.u32 %v77, 4294901760
    %466 = vmatpush1.msra.mxu0 %v465
    %467 = vmatprep.subr.mxu0 0.0
    %v468 = vand.u32 %v76, 4294901760
    %469 = vmatpush1.msra.mxu0 %v468
    %470 = vmatprep.subr.mxu0 0.0
    %v471 = vand.u32 %v75, 4294901760
    %472 = vmatpush1.msra.mxu0 %v471
    %473 = vmatprep.subr.mxu0 0.0
    %v474 = vand.u32 %v74, 4294901760
    %475 = vmatpush1.msra.mxu0 %v474
    %476 = vmatprep.subr.mxu0 0.0
    %v477 = vand.u32 %v73, 4294901760
    %478 = vmatpush1.msra.mxu0 %v477
    %479 = vmatprep.subr.mxu0 0.0
    %v480 = vand.u32 %v72, 4294901760
    %481 = vmatpush1.msra.mxu0 %v480
    %482 = vmatprep.subr.mxu0 0.0
    %483 = vmatpush2.msra.mxu0 0.0
    %484 = vmatprep.subr.mxu0 0.0
    %485 = vmatpush2.msra.mxu0 0.0
    %486 = vmatprep.subr.mxu0 0.0
    %487 = vmatpush2.msra.mxu0 0.0
    %488 = vmatprep.subr.mxu0 0.0
    %489 = vmatpush2.msra.mxu0 0.0
    %490 = vmatprep.subr.mxu0 0.0
    %491 = vmatpush2.msra.mxu0 0.0
    %492 = vmatprep.subr.mxu0 0.0
    %493 = vmatpush2.msra.mxu0 0.0
    %494 = vmatprep.subr.mxu0 0.0
    %495 = vmatpush2.msra.mxu0 0.0
    %496 = vmatprep.subr.mxu0 0.0
    %497 = vmatpush2.msra.mxu0 0.0
    %498 = vmatprep.subr.mxu0 0.0
    %499 = vmatpush2.msra.mxu0 0.0
    %500 = vmatprep.subr.mxu0 0.0
    %501 = vmatpush2.msra.mxu0 0.0
    %502 = vmatprep.subr.mxu0 0.0
    %503 = vmatpush2.msra.mxu0 0.0
    %504 = vmatprep.subr.mxu0 0.0
    %505 = vmatpush2.msra.mxu0 0.0
    %506 = vmatprep.subr.mxu0 0.0
    %507 = vmatpush2.msra.mxu0 0.0
    %508 = vmatprep.subr.mxu0 0.0
    %509 = vmatpush2.msra.mxu0 0.0
    %510 = vmatprep.subr.mxu0 0.0
    %511 = vmatpush2.msra.mxu0 0.0
    %512 = vmatprep.subr.mxu0 0.0
    %513 = vmatpush2.msra.mxu0 0.0
    %514 = vmatprep.mubr.f32.mxu0 0.0
    %v515 = vand.u32 %v71, 4294901760
    %v516 = vsub.f32 %v71, %v515
    %v517 = vand.u32 %v516, 4294901760
    %518 = vmatmul.mubr.f32.gmra.mxu0 %v517
    %v519 = vpop.f32.mrf.mxu0
    %v520 = vadd.f32 %v431, %v519
    %v521 = vpop.f32.mrf.mxu0
    %522 = vdwg.mxu0
    %523 = vmatprep.subr.mxu0 0.0
    %v524 = vand.u32 %v87, 4294901760
    %v525 = vsub.f32 %v87, %v524
    %v526 = vand.u32 %v525, 4294901760
    %527 = vmatpush1.msra.mxu0 %v526
    %528 = vmatprep.subr.mxu0 0.0
    %v529 = vand.u32 %v86, 4294901760
    %v530 = vsub.f32 %v86, %v529
    %v531 = vand.u32 %v530, 4294901760
    %532 = vmatpush1.msra.mxu0 %v531
    %533 = vmatprep.subr.mxu0 0.0
    %v534 = vand.u32 %v85, 4294901760
    %v535 = vsub.f32 %v85, %v534
    %v536 = vand.u32 %v535, 4294901760
    %537 = vmatpush1.msra.mxu0 %v536
    %538 = vmatprep.subr.mxu0 0.0
    %v539 = vand.u32 %v84, 4294901760
    %v540 = vsub.f32 %v84, %v539
    %v541 = vand.u32 %v540, 4294901760
    %542 = vmatpush1.msra.mxu0 %v541
    %543 = vmatprep.subr.mxu0 0.0
    %v544 = vand.u32 %v83, 4294901760
    %v545 = vsub.f32 %v83, %v544
    %v546 = vand.u32 %v545, 4294901760
    %547 = vmatpush1.msra.mxu0 %v546
    %548 = vmatprep.subr.mxu0 0.0
    %v549 = vand.u32 %v82, 4294901760
    %v550 = vsub.f32 %v82, %v549
    %v551 = vand.u32 %v550, 4294901760
    %552 = vmatpush1.msra.mxu0 %v551
    %553 = vmatprep.subr.mxu0 0.0
    %v554 = vand.u32 %v81, 4294901760
    %v555 = vsub.f32 %v81, %v554
    %v556 = vand.u32 %v555, 4294901760
    %557 = vmatpush1.msra.mxu0 %v556
    %558 = vmatprep.subr.mxu0 0.0
    %v559 = vand.u32 %v80, 4294901760
    %v560 = vsub.f32 %v80, %v559
    %v561 = vand.u32 %v560, 4294901760
    %562 = vmatpush1.msra.mxu0 %v561
    %563 = vmatprep.subr.mxu0 0.0
    %v564 = vand.u32 %v79, 4294901760
    %v565 = vsub.f32 %v79, %v564
    %v566 = vand.u32 %v565, 4294901760
    %567 = vmatpush1.msra.mxu0 %v566
    %568 = vmatprep.subr.mxu0 0.0
    %v569 = vand.u32 %v78, 4294901760
    %v570 = vsub.f32 %v78, %v569
    %v571 = vand.u32 %v570, 4294901760
    %572 = vmatpush1.msra.mxu0 %v571
    %573 = vmatprep.subr.mxu0 0.0
    %v574 = vand.u32 %v77, 4294901760
    %v575 = vsub.f32 %v77, %v574
    %v576 = vand.u32 %v575, 4294901760
    %577 = vmatpush1.msra.mxu0 %v576
    %578 = vmatprep.subr.mxu0 0.0
    %v579 = vand.u32 %v76, 4294901760
    %v580 = vsub.f32 %v76, %v579
    %v581 = vand.u32 %v580, 4294901760
    %582 = vmatpush1.msra.mxu0 %v581
    %583 = vmatprep.subr.mxu0 0.0
    %v584 = vand.u32 %v75, 4294901760
    %v585 = vsub.f32 %v75, %v584
    %v586 = vand.u32 %v585, 4294901760
    %587 = vmatpush1.msra.mxu0 %v586
    %588 = vmatprep.subr.mxu0 0.0
    %v589 = vand.u32 %v74, 4294901760
    %v590 = vsub.f32 %v74, %v589
    %v591 = vand.u32 %v590, 4294901760
    %592 = vmatpush1.msra.mxu0 %v591
    %593 = vmatprep.subr.mxu0 0.0
    %v594 = vand.u32 %v73, 4294901760
    %v595 = vsub.f32 %v73, %v594
    %v596 = vand.u32 %v595, 4294901760
    %597 = vmatpush1.msra.mxu0 %v596
    %598 = vmatprep.subr.mxu0 0.0
    %v599 = vand.u32 %v72, 4294901760
    %v600 = vsub.f32 %v72, %v599
    %v601 = vand.u32 %v600, 4294901760
    %602 = vmatpush1.msra.mxu0 %v601
    %603 = vmatprep.subr.mxu0 0.0
    %604 = vmatpush2.msra.mxu0 0.0
    %605 = vmatprep.subr.mxu0 0.0
    %606 = vmatpush2.msra.mxu0 0.0
    %607 = vmatprep.subr.mxu0 0.0
    %608 = vmatpush2.msra.mxu0 0.0
    %609 = vmatprep.subr.mxu0 0.0
    %610 = vmatpush2.msra.mxu0 0.0
    %611 = vmatprep.subr.mxu0 0.0
    %612 = vmatpush2.msra.mxu0 0.0
    %613 = vmatprep.subr.mxu0 0.0
    %614 = vmatpush2.msra.mxu0 0.0
    %615 = vmatprep.subr.mxu0 0.0
    %616 = vmatpush2.msra.mxu0 0.0
    %617 = vmatprep.subr.mxu0 0.0
    %618 = vmatpush2.msra.mxu0 0.0
    %619 = vmatprep.subr.mxu0 0.0
    %620 = vmatpush2.msra.mxu0 0.0
    %621 = vmatprep.subr.mxu0 0.0
    %622 = vmatpush2.msra.mxu0 0.0
    %623 = vmatprep.subr.mxu0 0.0
    %624 = vmatpush2.msra.mxu0 0.0
    %625 = vmatprep.subr.mxu0 0.0
    %626 = vmatpush2.msra.mxu0 0.0
    %627 = vmatprep.subr.mxu0 0.0
    %628 = vmatpush2.msra.mxu0 0.0
    %629 = vmatprep.subr.mxu0 0.0
    %630 = vmatpush2.msra.mxu0 0.0
    %631 = vmatprep.subr.mxu0 0.0
    %632 = vmatpush2.msra.mxu0 0.0
    %633 = vmatprep.subr.mxu0 0.0
    %634 = vmatpush2.msra.mxu0 0.0
    %635 = vmatprep.mubr.f32.mxu0 0.0
    %v636 = vand.u32 %v71, 4294901760
    %637 = vmatmul.mubr.f32.gmra.mxu0 %v636
    %v638 = vpop.f32.mrf.mxu0
    %v639 = vadd.f32 %v520, %v638
    %v640 = vpop.f32.mrf.mxu0
    %641 = vdwg.mxu0
    %642 = vmatprep.subr.mxu0 0.0
    %v643 = vand.u32 %v87, 4294901760
    %644 = vmatpush1.msra.mxu0 %v643
    %645 = vmatprep.subr.mxu0 0.0
    %v646 = vand.u32 %v86, 4294901760
    %647 = vmatpush1.msra.mxu0 %v646
    %648 = vmatprep.subr.mxu0 0.0
    %v649 = vand.u32 %v85, 4294901760
    %650 = vmatpush1.msra.mxu0 %v649
    %651 = vmatprep.subr.mxu0 0.0
    %v652 = vand.u32 %v84, 4294901760
    %653 = vmatpush1.msra.mxu0 %v652
    %654 = vmatprep.subr.mxu0 0.0
    %v655 = vand.u32 %v83, 4294901760
    %656 = vmatpush1.msra.mxu0 %v655
    %657 = vmatprep.subr.mxu0 0.0
    %v658 = vand.u32 %v82, 4294901760
    %659 = vmatpush1.msra.mxu0 %v658
    %660 = vmatprep.subr.mxu0 0.0
    %v661 = vand.u32 %v81, 4294901760
    %662 = vmatpush1.msra.mxu0 %v661
    %663 = vmatprep.subr.mxu0 0.0
    %v664 = vand.u32 %v80, 4294901760
    %665 = vmatpush1.msra.mxu0 %v664
    %666 = vmatprep.subr.mxu0 0.0
    %v667 = vand.u32 %v79, 4294901760
    %668 = vmatpush1.msra.mxu0 %v667
    %669 = vmatprep.subr.mxu0 0.0
    %v670 = vand.u32 %v78, 4294901760
    %671 = vmatpush1.msra.mxu0 %v670
    %672 = vmatprep.subr.mxu0 0.0
    %v673 = vand.u32 %v77, 4294901760
    %674 = vmatpush1.msra.mxu0 %v673
    %675 = vmatprep.subr.mxu0 0.0
    %v676 = vand.u32 %v76, 4294901760
    %677 = vmatpush1.msra.mxu0 %v676
    %678 = vmatprep.subr.mxu0 0.0
    %v679 = vand.u32 %v75, 4294901760
    %680 = vmatpush1.msra.mxu0 %v679
    %681 = vmatprep.subr.mxu0 0.0
    %v682 = vand.u32 %v74, 4294901760
    %683 = vmatpush1.msra.mxu0 %v682
    %684 = vmatprep.subr.mxu0 0.0
    %v685 = vand.u32 %v73, 4294901760
    %686 = vmatpush1.msra.mxu0 %v685
    %687 = vmatprep.subr.mxu0 0.0
    %v688 = vand.u32 %v72, 4294901760
    %689 = vmatpush1.msra.mxu0 %v688
    %690 = vmatprep.subr.mxu0 0.0
    %691 = vmatpush2.msra.mxu0 0.0
    %692 = vmatprep.subr.mxu0 0.0
    %693 = vmatpush2.msra.mxu0 0.0
    %694 = vmatprep.subr.mxu0 0.0
    %695 = vmatpush2.msra.mxu0 0.0
    %696 = vmatprep.subr.mxu0 0.0
    %697 = vmatpush2.msra.mxu0 0.0
    %698 = vmatprep.subr.mxu0 0.0
    %699 = vmatpush2.msra.mxu0 0.0
    %700 = vmatprep.subr.mxu0 0.0
    %701 = vmatpush2.msra.mxu0 0.0
    %702 = vmatprep.subr.mxu0 0.0
    %703 = vmatpush2.msra.mxu0 0.0
    %704 = vmatprep.subr.mxu0 0.0
    %705 = vmatpush2.msra.mxu0 0.0
    %706 = vmatprep.subr.mxu0 0.0
    %707 = vmatpush2.msra.mxu0 0.0
    %708 = vmatprep.subr.mxu0 0.0
    %709 = vmatpush2.msra.mxu0 0.0
    %710 = vmatprep.subr.mxu0 0.0
    %711 = vmatpush2.msra.mxu0 0.0
    %712 = vmatprep.subr.mxu0 0.0
    %713 = vmatpush2.msra.mxu0 0.0
    %714 = vmatprep.subr.mxu0 0.0
    %715 = vmatpush2.msra.mxu0 0.0
    %716 = vmatprep.subr.mxu0 0.0
    %717 = vmatpush2.msra.mxu0 0.0
    %718 = vmatprep.subr.mxu0 0.0
    %719 = vmatpush2.msra.mxu0 0.0
    %720 = vmatprep.subr.mxu0 0.0
    %721 = vmatpush2.msra.mxu0 0.0
    %722 = vmatprep.mubr.f32.mxu0 0.0
    %v723 = vand.u32 %v71, 4294901760
    %724 = vmatmul.mubr.f32.gmra.mxu0 %v723
    %v725 = vpop.f32.mrf.mxu0
    %v726 = vadd.f32 %v639, %v725
    %v727 = vpop.f32.mrf.mxu0
    %728 = vdwg.mxu0
    %v729 = vld [vmem:[#allocation8] sm:$0xff]
    %v730 = vld [vmem:[#allocation8 + $0x8] sm:$0xff]
    %v731 = vld [vmem:[#allocation8 + $0x10] sm:$0xff]
    %v732 = vld [vmem:[#allocation8 + $0x18] sm:$0xff]
    %v733 = vld [vmem:[#allocation8 + $0x20] sm:$0xff]
    %v734 = vld [vmem:[#allocation8 + $0x28] sm:$0xff]
    %v735 = vld [vmem:[#allocation8 + $0x30] sm:$0xff]
    %v736 = vld [vmem:[#allocation8 + $0x38] sm:$0xff]
    %v737 = vld [vmem:[#allocation8 + $0x40] sm:$0xff]
    %v738 = vld [vmem:[#allocation8 + $0x48] sm:$0xff]
    %v739 = vld [vmem:[#allocation8 + $0x50] sm:$0xff]
    %v740 = vld [vmem:[#allocation8 + $0x58] sm:$0xff]
    %v741 = vld [vmem:[#allocation8 + $0x60] sm:$0xff]
    %v742 = vld [vmem:[#allocation8 + $0x68] sm:$0xff]
    %v743 = vld [vmem:[#allocation8 + $0x70] sm:$0xff]
    %v744 = vld [vmem:[#allocation8 + $0x78] sm:$0xff]
    %745 = vmatprep.subr.mxu0 0.0
    %v746 = vand.u32 %v744, 4294901760
    %747 = vmatpush1.msra.mxu0 %v746
    %748 = vmatprep.subr.mxu0 0.0
    %v749 = vand.u32 %v743, 4294901760
    %750 = vmatpush1.msra.mxu0 %v749
    %751 = vmatprep.subr.mxu0 0.0
    %v752 = vand.u32 %v742, 4294901760
    %753 = vmatpush1.msra.mxu0 %v752
    %754 = vmatprep.subr.mxu0 0.0
    %v755 = vand.u32 %v741, 4294901760
    %756 = vmatpush1.msra.mxu0 %v755
    %757 = vmatprep.subr.mxu0 0.0
    %v758 = vand.u32 %v740, 4294901760
    %759 = vmatpush1.msra.mxu0 %v758
    %760 = vmatprep.subr.mxu0 0.0
    %v761 = vand.u32 %v739, 4294901760
    %762 = vmatpush1.msra.mxu0 %v761
    %763 = vmatprep.subr.mxu0 0.0
    %v764 = vand.u32 %v738, 4294901760
    %765 = vmatpush1.msra.mxu0 %v764
    %766 = vmatprep.subr.mxu0 0.0
    %v767 = vand.u32 %v737, 4294901760
    %768 = vmatpush1.msra.mxu0 %v767
    %769 = vmatprep.subr.mxu0 0.0
    %v770 = vand.u32 %v736, 4294901760
    %771 = vmatpush1.msra.mxu0 %v770
    %772 = vmatprep.subr.mxu0 0.0
    %v773 = vand.u32 %v735, 4294901760
    %774 = vmatpush1.msra.mxu0 %v773
    %775 = vmatprep.subr.mxu0 0.0
    %v776 = vand.u32 %v734, 4294901760
    %777 = vmatpush1.msra.mxu0 %v776
    %778 = vmatprep.subr.mxu0 0.0
    %v779 = vand.u32 %v733, 4294901760
    %780 = vmatpush1.msra.mxu0 %v779
    %781 = vmatprep.subr.mxu0 0.0
    %v782 = vand.u32 %v732, 4294901760
    %783 = vmatpush1.msra.mxu0 %v782
    %784 = vmatprep.subr.mxu0 0.0
    %v785 = vand.u32 %v731, 4294901760
    %786 = vmatpush1.msra.mxu0 %v785
    %787 = vmatprep.subr.mxu0 0.0
    %v788 = vand.u32 %v730, 4294901760
    %789 = vmatpush1.msra.mxu0 %v788
    %790 = vmatprep.subr.mxu0 0.0
    %v791 = vand.u32 %v729, 4294901760
    %792 = vmatpush1.msra.mxu0 %v791
    %793 = vmatprep.subr.mxu0 0.0
    %794 = vmatpush2.msra.mxu0 0.0
    %795 = vmatprep.subr.mxu0 0.0
    %796 = vmatpush2.msra.mxu0 0.0
    %797 = vmatprep.subr.mxu0 0.0
    %798 = vmatpush2.msra.mxu0 0.0
    %799 = vmatprep.subr.mxu0 0.0
    %800 = vmatpush2.msra.mxu0 0.0
    %801 = vmatprep.subr.mxu0 0.0
    %802 = vmatpush2.msra.mxu0 0.0
    %803 = vmatprep.subr.mxu0 0.0
    %804 = vmatpush2.msra.mxu0 0.0
    %805 = vmatprep.subr.mxu0 0.0
    %806 = vmatpush2.msra.mxu0 0.0
    %807 = vmatprep.subr.mxu0 0.0
    %808 = vmatpush2.msra.mxu0 0.0
    %809 = vmatprep.subr.mxu0 0.0
    %810 = vmatpush2.msra.mxu0 0.0
    %811 = vmatprep.subr.mxu0 0.0
    %812 = vmatpush2.msra.mxu0 0.0
    %813 = vmatprep.subr.mxu0 0.0
    %814 = vmatpush2.msra.mxu0 0.0
    %815 = vmatprep.subr.mxu0 0.0
    %816 = vmatpush2.msra.mxu0 0.0
    %817 = vmatprep.subr.mxu0 0.0
    %818 = vmatpush2.msra.mxu0 0.0
    %819 = vmatprep.subr.mxu0 0.0
    %820 = vmatpush2.msra.mxu0 0.0
    %821 = vmatprep.subr.mxu0 0.0
    %822 = vmatpush2.msra.mxu0 0.0
    %823 = vmatprep.subr.mxu0 0.0
    %824 = vmatpush2.msra.mxu0 0.0
    %825 = vmatprep.mubr.f32.mxu0 0.0
    %v826 = vand.u32 %v726, 4294901760
    %v827 = vsub.f32 %v726, %v826
    %v828 = vand.u32 %v827, 4294901760
    %v829 = vsub.f32 %v827, %v828
    %v830 = vand.u32 %v829, 4294901760
    %831 = vmatmul.mubr.f32.gmra.mxu0 %v830
    %v832 = vpop.f32.mrf.mxu0
    %v833 = vadd.f32 0.0, %v832
    %v834 = vpop.f32.mrf.mxu0
    %835 = vdwg.mxu0
    %836 = vmatprep.subr.mxu0 0.0
    %v837 = vand.u32 %v744, 4294901760
    %v838 = vsub.f32 %v744, %v837
    %v839 = vand.u32 %v838, 4294901760
    %v840 = vsub.f32 %v838, %v839
    %v841 = vand.u32 %v840, 4294901760
    %842 = vmatpush1.msra.mxu0 %v841
    %843 = vmatprep.subr.mxu0 0.0
    %v844 = vand.u32 %v743, 4294901760
    %v845 = vsub.f32 %v743, %v844
    %v846 = vand.u32 %v845, 4294901760
    %v847 = vsub.f32 %v845, %v846
    %v848 = vand.u32 %v847, 4294901760
    %849 = vmatpush1.msra.mxu0 %v848
    %850 = vmatprep.subr.mxu0 0.0
    %v851 = vand.u32 %v742, 4294901760
    %v852 = vsub.f32 %v742, %v851
    %v853 = vand.u32 %v852, 4294901760
    %v854 = vsub.f32 %v852, %v853
    %v855 = vand.u32 %v854, 4294901760
    %856 = vmatpush1.msra.mxu0 %v855
    %857 = vmatprep.subr.mxu0 0.0
    %v858 = vand.u32 %v741, 4294901760
    %v859 = vsub.f32 %v741, %v858
    %v860 = vand.u32 %v859, 4294901760
    %v861 = vsub.f32 %v859, %v860
    %v862 = vand.u32 %v861, 4294901760
    %863 = vmatpush1.msra.mxu0 %v862
    %864 = vmatprep.subr.mxu0 0.0
    %v865 = vand.u32 %v740, 4294901760
    %v866 = vsub.f32 %v740, %v865
    %v867 = vand.u32 %v866, 4294901760
    %v868 = vsub.f32 %v866, %v867
    %v869 = vand.u32 %v868, 4294901760
    %870 = vmatpush1.msra.mxu0 %v869
    %871 = vmatprep.subr.mxu0 0.0
    %v872 = vand.u32 %v739, 4294901760
    %v873 = vsub.f32 %v739, %v872
    %v874 = vand.u32 %v873, 4294901760
    %v875 = vsub.f32 %v873, %v874
    %v876 = vand.u32 %v875, 4294901760
    %877 = vmatpush1.msra.mxu0 %v876
    %878 = vmatprep.subr.mxu0 0.0
    %v879 = vand.u32 %v738, 4294901760
    %v880 = vsub.f32 %v738, %v879
    %v881 = vand.u32 %v880, 4294901760
    %v882 = vsub.f32 %v880, %v881
    %v883 = vand.u32 %v882, 4294901760
    %884 = vmatpush1.msra.mxu0 %v883
    %885 = vmatprep.subr.mxu0 0.0
    %v886 = vand.u32 %v737, 4294901760
    %v887 = vsub.f32 %v737, %v886
    %v888 = vand.u32 %v887, 4294901760
    %v889 = vsub.f32 %v887, %v888
    %v890 = vand.u32 %v889, 4294901760
    %891 = vmatpush1.msra.mxu0 %v890
    %892 = vmatprep.subr.mxu0 0.0
    %v893 = vand.u32 %v736, 4294901760
    %v894 = vsub.f32 %v736, %v893
    %v895 = vand.u32 %v894, 4294901760
    %v896 = vsub.f32 %v894, %v895
    %v897 = vand.u32 %v896, 4294901760
    %898 = vmatpush1.msra.mxu0 %v897
    %899 = vmatprep.subr.mxu0 0.0
    %v900 = vand.u32 %v735, 4294901760
    %v901 = vsub.f32 %v735, %v900
    %v902 = vand.u32 %v901, 4294901760
    %v903 = vsub.f32 %v901, %v902
    %v904 = vand.u32 %v903, 4294901760
    %905 = vmatpush1.msra.mxu0 %v904
    %906 = vmatprep.subr.mxu0 0.0
    %v907 = vand.u32 %v734, 4294901760
    %v908 = vsub.f32 %v734, %v907
    %v909 = vand.u32 %v908, 4294901760
    %v910 = vsub.f32 %v908, %v909
    %v911 = vand.u32 %v910, 4294901760
    %912 = vmatpush1.msra.mxu0 %v911
    %913 = vmatprep.subr.mxu0 0.0
    %v914 = vand.u32 %v733, 4294901760
    %v915 = vsub.f32 %v733, %v914
    %v916 = vand.u32 %v915, 4294901760
    %v917 = vsub.f32 %v915, %v916
    %v918 = vand.u32 %v917, 4294901760
    %919 = vmatpush1.msra.mxu0 %v918
    %920 = vmatprep.subr.mxu0 0.0
    %v921 = vand.u32 %v732, 4294901760
    %v922 = vsub.f32 %v732, %v921
    %v923 = vand.u32 %v922, 4294901760
    %v924 = vsub.f32 %v922, %v923
    %v925 = vand.u32 %v924, 4294901760
    %926 = vmatpush1.msra.mxu0 %v925
    %927 = vmatprep.subr.mxu0 0.0
    %v928 = vand.u32 %v731, 4294901760
    %v929 = vsub.f32 %v731, %v928
    %v930 = vand.u32 %v929, 4294901760
    %v931 = vsub.f32 %v929, %v930
    %v932 = vand.u32 %v931, 4294901760
    %933 = vmatpush1.msra.mxu0 %v932
    %934 = vmatprep.subr.mxu0 0.0
    %v935 = vand.u32 %v730, 4294901760
    %v936 = vsub.f32 %v730, %v935
    %v937 = vand.u32 %v936, 4294901760
    %v938 = vsub.f32 %v936, %v937
    %v939 = vand.u32 %v938, 4294901760
    %940 = vmatpush1.msra.mxu0 %v939
    %941 = vmatprep.subr.mxu0 0.0
    %v942 = vand.u32 %v729, 4294901760
    %v943 = vsub.f32 %v729, %v942
    %v944 = vand.u32 %v943, 4294901760
    %v945 = vsub.f32 %v943, %v944
    %v946 = vand.u32 %v945, 4294901760
    %947 = vmatpush1.msra.mxu0 %v946
    %948 = vmatprep.subr.mxu0 0.0
    %949 = vmatpush2.msra.mxu0 0.0
    %950 = vmatprep.subr.mxu0 0.0
    %951 = vmatpush2.msra.mxu0 0.0
    %952 = vmatprep.subr.mxu0 0.0
    %953 = vmatpush2.msra.mxu0 0.0
    %954 = vmatprep.subr.mxu0 0.0
    %955 = vmatpush2.msra.mxu0 0.0
    %956 = vmatprep.subr.mxu0 0.0
    %957 = vmatpush2.msra.mxu0 0.0
    %958 = vmatprep.subr.mxu0 0.0
    %959 = vmatpush2.msra.mxu0 0.0
    %960 = vmatprep.subr.mxu0 0.0
    %961 = vmatpush2.msra.mxu0 0.0
    %962 = vmatprep.subr.mxu0 0.0
    %963 = vmatpush2.msra.mxu0 0.0
    %964 = vmatprep.subr.mxu0 0.0
    %965 = vmatpush2.msra.mxu0 0.0
    %966 = vmatprep.subr.mxu0 0.0
    %967 = vmatpush2.msra.mxu0 0.0
    %968 = vmatprep.subr.mxu0 0.0
    %969 = vmatpush2.msra.mxu0 0.0
    %970 = vmatprep.subr.mxu0 0.0
    %971 = vmatpush2.msra.mxu0 0.0
    %972 = vmatprep.subr.mxu0 0.0
    %973 = vmatpush2.msra.mxu0 0.0
    %974 = vmatprep.subr.mxu0 0.0
    %975 = vmatpush2.msra.mxu0 0.0
    %976 = vmatprep.subr.mxu0 0.0
    %977 = vmatpush2.msra.mxu0 0.0
    %978 = vmatprep.subr.mxu0 0.0
    %979 = vmatpush2.msra.mxu0 0.0
    %980 = vmatprep.mubr.f32.mxu0 0.0
    %v981 = vand.u32 %v726, 4294901760
    %982 = vmatmul.mubr.f32.gmra.mxu0 %v981
    %v983 = vpop.f32.mrf.mxu0
    %v984 = vadd.f32 %v833, %v983
    %v985 = vpop.f32.mrf.mxu0
    %986 = vdwg.mxu0
    %987 = vmatprep.subr.mxu0 0.0
    %v988 = vand.u32 %v744, 4294901760
    %v989 = vsub.f32 %v744, %v988
    %990 = vmatpush1.msra.mxu0 %v989
    %991 = vmatprep.subr.mxu0 0.0
    %v992 = vand.u32 %v743, 4294901760
    %v993 = vsub.f32 %v743, %v992
    %994 = vmatpush1.msra.mxu0 %v993
    %995 = vmatprep.subr.mxu0 0.0
    %v996 = vand.u32 %v742, 4294901760
    %v997 = vsub.f32 %v742, %v996
    %998 = vmatpush1.msra.mxu0 %v997
    %999 = vmatprep.subr.mxu0 0.0
    %v1000 = vand.u32 %v741, 4294901760
    %v1001 = vsub.f32 %v741, %v1000
    %1002 = vmatpush1.msra.mxu0 %v1001
    %1003 = vmatprep.subr.mxu0 0.0
    %v1004 = vand.u32 %v740, 4294901760
    %v1005 = vsub.f32 %v740, %v1004
    %1006 = vmatpush1.msra.mxu0 %v1005
    %1007 = vmatprep.subr.mxu0 0.0
    %v1008 = vand.u32 %v739, 4294901760
    %v1009 = vsub.f32 %v739, %v1008
    %1010 = vmatpush1.msra.mxu0 %v1009
    %1011 = vmatprep.subr.mxu0 0.0
    %v1012 = vand.u32 %v738, 4294901760
    %v1013 = vsub.f32 %v738, %v1012
    %1014 = vmatpush1.msra.mxu0 %v1013
    %1015 = vmatprep.subr.mxu0 0.0
    %v1016 = vand.u32 %v737, 4294901760
    %v1017 = vsub.f32 %v737, %v1016
    %1018 = vmatpush1.msra.mxu0 %v1017
    %1019 = vmatprep.subr.mxu0 0.0
    %v1020 = vand.u32 %v736, 4294901760
    %v1021 = vsub.f32 %v736, %v1020
    %1022 = vmatpush1.msra.mxu0 %v1021
    %1023 = vmatprep.subr.mxu0 0.0
    %v1024 = vand.u32 %v735, 4294901760
    %v1025 = vsub.f32 %v735, %v1024
    %1026 = vmatpush1.msra.mxu0 %v1025
    %1027 = vmatprep.subr.mxu0 0.0
    %v1028 = vand.u32 %v734, 4294901760
    %v1029 = vsub.f32 %v734, %v1028
    %1030 = vmatpush1.msra.mxu0 %v1029
    %1031 = vmatprep.subr.mxu0 0.0
    %v1032 = vand.u32 %v733, 4294901760
    %v1033 = vsub.f32 %v733, %v1032
    %1034 = vmatpush1.msra.mxu0 %v1033
    %1035 = vmatprep.subr.mxu0 0.0
    %v1036 = vand.u32 %v732, 4294901760
    %v1037 = vsub.f32 %v732, %v1036
    %1038 = vmatpush1.msra.mxu0 %v1037
    %1039 = vmatprep.subr.mxu0 0.0
    %v1040 = vand.u32 %v731, 4294901760
    %v1041 = vsub.f32 %v731, %v1040
    %1042 = vmatpush1.msra.mxu0 %v1041
    %1043 = vmatprep.subr.mxu0 0.0
    %v1044 = vand.u32 %v730, 4294901760
    %v1045 = vsub.f32 %v730, %v1044
    %1046 = vmatpush1.msra.mxu0 %v1045
    %1047 = vmatprep.subr.mxu0 0.0
    %v1048 = vand.u32 %v729, 4294901760
    %v1049 = vsub.f32 %v729, %v1048
    %1050 = vmatpush1.msra.mxu0 %v1049
    %1051 = vmatprep.subr.mxu0 0.0
    %1052 = vmatpush2.msra.mxu0 0.0
    %1053 = vmatprep.subr.mxu0 0.0
    %1054 = vmatpush2.msra.mxu0 0.0
    %1055 = vmatprep.subr.mxu0 0.0
    %1056 = vmatpush2.msra.mxu0 0.0
    %1057 = vmatprep.subr.mxu0 0.0
    %1058 = vmatpush2.msra.mxu0 0.0
    %1059 = vmatprep.subr.mxu0 0.0
    %1060 = vmatpush2.msra.mxu0 0.0
    %1061 = vmatprep.subr.mxu0 0.0
    %1062 = vmatpush2.msra.mxu0 0.0
    %1063 = vmatprep.subr.mxu0 0.0
    %1064 = vmatpush2.msra.mxu0 0.0
    %1065 = vmatprep.subr.mxu0 0.0
    %1066 = vmatpush2.msra.mxu0 0.0
    %1067 = vmatprep.subr.mxu0 0.0
    %1068 = vmatpush2.msra.mxu0 0.0
    %1069 = vmatprep.subr.mxu0 0.0
    %1070 = vmatpush2.msra.mxu0 0.0
    %1071 = vmatprep.subr.mxu0 0.0
    %1072 = vmatpush2.msra.mxu0 0.0
    %1073 = vmatprep.subr.mxu0 0.0
    %1074 = vmatpush2.msra.mxu0 0.0
    %1075 = vmatprep.subr.mxu0 0.0
    %1076 = vmatpush2.msra.mxu0 0.0
    %1077 = vmatprep.subr.mxu0 0.0
    %1078 = vmatpush2.msra.mxu0 0.0
    %1079 = vmatprep.subr.mxu0 0.0
    %1080 = vmatpush2.msra.mxu0 0.0
    %1081 = vmatprep.subr.mxu0 0.0
    %1082 = vmatpush2.msra.mxu0 0.0
    %1083 = vmatprep.mubr.f32.mxu0 0.0
    %v1084 = vand.u32 %v726, 4294901760
    %v1085 = vsub.f32 %v726, %v1084
    %1086 = vmatmul.mubr.f32.gmra.mxu0 %v1085
    %v1087 = vpop.f32.mrf.mxu0
    %v1088 = vadd.f32 %v984, %v1087
    %v1089 = vpop.f32.mrf.mxu0
    %1090 = vdwg.mxu0
    %1091 = vmatprep.subr.mxu0 0.0
    %v1092 = vand.u32 %v744, 4294901760
    %1093 = vmatpush1.msra.mxu0 %v1092
    %1094 = vmatprep.subr.mxu0 0.0
    %v1095 = vand.u32 %v743, 4294901760
    %1096 = vmatpush1.msra.mxu0 %v1095
    %1097 = vmatprep.subr.mxu0 0.0
    %v1098 = vand.u32 %v742, 4294901760
    %1099 = vmatpush1.msra.mxu0 %v1098
    %1100 = vmatprep.subr.mxu0 0.0
    %v1101 = vand.u32 %v741, 4294901760
    %1102 = vmatpush1.msra.mxu0 %v1101
    %1103 = vmatprep.subr.mxu0 0.0
    %v1104 = vand.u32 %v740, 4294901760
    %1105 = vmatpush1.msra.mxu0 %v1104
    %1106 = vmatprep.subr.mxu0 0.0
    %v1107 = vand.u32 %v739, 4294901760
    %1108 = vmatpush1.msra.mxu0 %v1107
    %1109 = vmatprep.subr.mxu0 0.0
    %v1110 = vand.u32 %v738, 4294901760
    %1111 = vmatpush1.msra.mxu0 %v1110
    %1112 = vmatprep.subr.mxu0 0.0
    %v1113 = vand.u32 %v737, 4294901760
    %1114 = vmatpush1.msra.mxu0 %v1113
    %1115 = vmatprep.subr.mxu0 0.0
    %v1116 = vand.u32 %v736, 4294901760
    %1117 = vmatpush1.msra.mxu0 %v1116
    %1118 = vmatprep.subr.mxu0 0.0
    %v1119 = vand.u32 %v735, 4294901760
    %1120 = vmatpush1.msra.mxu0 %v1119
    %1121 = vmatprep.subr.mxu0 0.0
    %v1122 = vand.u32 %v734, 4294901760
    %1123 = vmatpush1.msra.mxu0 %v1122
    %1124 = vmatprep.subr.mxu0 0.0
    %v1125 = vand.u32 %v733, 4294901760
    %1126 = vmatpush1.msra.mxu0 %v1125
    %1127 = vmatprep.subr.mxu0 0.0
    %v1128 = vand.u32 %v732, 4294901760
    %1129 = vmatpush1.msra.mxu0 %v1128
    %1130 = vmatprep.subr.mxu0 0.0
    %v1131 = vand.u32 %v731, 4294901760
    %1132 = vmatpush1.msra.mxu0 %v1131
    %1133 = vmatprep.subr.mxu0 0.0
    %v1134 = vand.u32 %v730, 4294901760
    %1135 = vmatpush1.msra.mxu0 %v1134
    %1136 = vmatprep.subr.mxu0 0.0
    %v1137 = vand.u32 %v729, 4294901760
    %1138 = vmatpush1.msra.mxu0 %v1137
    %1139 = vmatprep.subr.mxu0 0.0
    %1140 = vmatpush2.msra.mxu0 0.0
    %1141 = vmatprep.subr.mxu0 0.0
    %1142 = vmatpush2.msra.mxu0 0.0
    %1143 = vmatprep.subr.mxu0 0.0
    %1144 = vmatpush2.msra.mxu0 0.0
    %1145 = vmatprep.subr.mxu0 0.0
    %1146 = vmatpush2.msra.mxu0 0.0
    %1147 = vmatprep.subr.mxu0 0.0
    %1148 = vmatpush2.msra.mxu0 0.0
    %1149 = vmatprep.subr.mxu0 0.0
    %1150 = vmatpush2.msra.mxu0 0.0
    %1151 = vmatprep.subr.mxu0 0.0
    %1152 = vmatpush2.msra.mxu0 0.0
    %1153 = vmatprep.subr.mxu0 0.0
    %1154 = vmatpush2.msra.mxu0 0.0
    %1155 = vmatprep.subr.mxu0 0.0
    %1156 = vmatpush2.msra.mxu0 0.0
    %1157 = vmatprep.subr.mxu0 0.0
    %1158 = vmatpush2.msra.mxu0 0.0
    %1159 = vmatprep.subr.mxu0 0.0
    %1160 = vmatpush2.msra.mxu0 0.0
    %1161 = vmatprep.subr.mxu0 0.0
    %1162 = vmatpush2.msra.mxu0 0.0
    %1163 = vmatprep.subr.mxu0 0.0
    %1164 = vmatpush2.msra.mxu0 0.0
    %1165 = vmatprep.subr.mxu0 0.0
    %1166 = vmatpush2.msra.mxu0 0.0
    %1167 = vmatprep.subr.mxu0 0.0
    %1168 = vmatpush2.msra.mxu0 0.0
    %1169 = vmatprep.subr.mxu0 0.0
    %1170 = vmatpush2.msra.mxu0 0.0
    %1171 = vmatprep.mubr.f32.mxu0 0.0
    %v1172 = vand.u32 %v726, 4294901760
    %v1173 = vsub.f32 %v726, %v1172
    %v1174 = vand.u32 %v1173, 4294901760
    %1175 = vmatmul.mubr.f32.gmra.mxu0 %v1174
    %v1176 = vpop.f32.mrf.mxu0
    %v1177 = vadd.f32 %v1088, %v1176
    %v1178 = vpop.f32.mrf.mxu0
    %1179 = vdwg.mxu0
    %1180 = vmatprep.subr.mxu0 0.0
    %v1181 = vand.u32 %v744, 4294901760
    %v1182 = vsub.f32 %v744, %v1181
    %v1183 = vand.u32 %v1182, 4294901760
    %1184 = vmatpush1.msra.mxu0 %v1183
    %1185 = vmatprep.subr.mxu0 0.0
    %v1186 = vand.u32 %v743, 4294901760
    %v1187 = vsub.f32 %v743, %v1186
    %v1188 = vand.u32 %v1187, 4294901760
    %1189 = vmatpush1.msra.mxu0 %v1188
    %1190 = vmatprep.subr.mxu0 0.0
    %v1191 = vand.u32 %v742, 4294901760
    %v1192 = vsub.f32 %v742, %v1191
    %v1193 = vand.u32 %v1192, 4294901760
    %1194 = vmatpush1.msra.mxu0 %v1193
    %1195 = vmatprep.subr.mxu0 0.0
    %v1196 = vand.u32 %v741, 4294901760
    %v1197 = vsub.f32 %v741, %v1196
    %v1198 = vand.u32 %v1197, 4294901760
    %1199 = vmatpush1.msra.mxu0 %v1198
    %1200 = vmatprep.subr.mxu0 0.0
    %v1201 = vand.u32 %v740, 4294901760
    %v1202 = vsub.f32 %v740, %v1201
    %v1203 = vand.u32 %v1202, 4294901760
    %1204 = vmatpush1.msra.mxu0 %v1203
    %1205 = vmatprep.subr.mxu0 0.0
    %v1206 = vand.u32 %v739, 4294901760
    %v1207 = vsub.f32 %v739, %v1206
    %v1208 = vand.u32 %v1207, 4294901760
    %1209 = vmatpush1.msra.mxu0 %v1208
    %1210 = vmatprep.subr.mxu0 0.0
    %v1211 = vand.u32 %v738, 4294901760
    %v1212 = vsub.f32 %v738, %v1211
    %v1213 = vand.u32 %v1212, 4294901760
    %1214 = vmatpush1.msra.mxu0 %v1213
    %1215 = vmatprep.subr.mxu0 0.0
    %v1216 = vand.u32 %v737, 4294901760
    %v1217 = vsub.f32 %v737, %v1216
    %v1218 = vand.u32 %v1217, 4294901760
    %1219 = vmatpush1.msra.mxu0 %v1218
    %1220 = vmatprep.subr.mxu0 0.0
    %v1221 = vand.u32 %v736, 4294901760
    %v1222 = vsub.f32 %v736, %v1221
    %v1223 = vand.u32 %v1222, 4294901760
    %1224 = vmatpush1.msra.mxu0 %v1223
    %1225 = vmatprep.subr.mxu0 0.0
    %v1226 = vand.u32 %v735, 4294901760
    %v1227 = vsub.f32 %v735, %v1226
    %v1228 = vand.u32 %v1227, 4294901760
    %1229 = vmatpush1.msra.mxu0 %v1228
    %1230 = vmatprep.subr.mxu0 0.0
    %v1231 = vand.u32 %v734, 4294901760
    %v1232 = vsub.f32 %v734, %v1231
    %v1233 = vand.u32 %v1232, 4294901760
    %1234 = vmatpush1.msra.mxu0 %v1233
    %1235 = vmatprep.subr.mxu0 0.0
    %v1236 = vand.u32 %v733, 4294901760
    %v1237 = vsub.f32 %v733, %v1236
    %v1238 = vand.u32 %v1237, 4294901760
    %1239 = vmatpush1.msra.mxu0 %v1238
    %1240 = vmatprep.subr.mxu0 0.0
    %v1241 = vand.u32 %v732, 4294901760
    %v1242 = vsub.f32 %v732, %v1241
    %v1243 = vand.u32 %v1242, 4294901760
    %1244 = vmatpush1.msra.mxu0 %v1243
    %1245 = vmatprep.subr.mxu0 0.0
    %v1246 = vand.u32 %v731, 4294901760
    %v1247 = vsub.f32 %v731, %v1246
    %v1248 = vand.u32 %v1247, 4294901760
    %1249 = vmatpush1.msra.mxu0 %v1248
    %1250 = vmatprep.subr.mxu0 0.0
    %v1251 = vand.u32 %v730, 4294901760
    %v1252 = vsub.f32 %v730, %v1251
    %v1253 = vand.u32 %v1252, 4294901760
    %1254 = vmatpush1.msra.mxu0 %v1253
    %1255 = vmatprep.subr.mxu0 0.0
    %v1256 = vand.u32 %v729, 4294901760
    %v1257 = vsub.f32 %v729, %v1256
    %v1258 = vand.u32 %v1257, 4294901760
    %1259 = vmatpush1.msra.mxu0 %v1258
    %1260 = vmatprep.subr.mxu0 0.0
    %1261 = vmatpush2.msra.mxu0 0.0
    %1262 = vmatprep.subr.mxu0 0.0
    %1263 = vmatpush2.msra.mxu0 0.0
    %1264 = vmatprep.subr.mxu0 0.0
    %1265 = vmatpush2.msra.mxu0 0.0
    %1266 = vmatprep.subr.mxu0 0.0
    %1267 = vmatpush2.msra.mxu0 0.0
    %1268 = vmatprep.subr.mxu0 0.0
    %1269 = vmatpush2.msra.mxu0 0.0
    %1270 = vmatprep.subr.mxu0 0.0
    %1271 = vmatpush2.msra.mxu0 0.0
    %1272 = vmatprep.subr.mxu0 0.0
    %1273 = vmatpush2.msra.mxu0 0.0
    %1274 = vmatprep.subr.mxu0 0.0
    %1275 = vmatpush2.msra.mxu0 0.0
    %1276 = vmatprep.subr.mxu0 0.0
    %1277 = vmatpush2.msra.mxu0 0.0
    %1278 = vmatprep.subr.mxu0 0.0
    %1279 = vmatpush2.msra.mxu0 0.0
    %1280 = vmatprep.subr.mxu0 0.0
    %1281 = vmatpush2.msra.mxu0 0.0
    %1282 = vmatprep.subr.mxu0 0.0
    %1283 = vmatpush2.msra.mxu0 0.0
    %1284 = vmatprep.subr.mxu0 0.0
    %1285 = vmatpush2.msra.mxu0 0.0
    %1286 = vmatprep.subr.mxu0 0.0
    %1287 = vmatpush2.msra.mxu0 0.0
    %1288 = vmatprep.subr.mxu0 0.0
    %1289 = vmatpush2.msra.mxu0 0.0
    %1290 = vmatprep.subr.mxu0 0.0
    %1291 = vmatpush2.msra.mxu0 0.0
    %1292 = vmatprep.mubr.f32.mxu0 0.0
    %v1293 = vand.u32 %v726, 4294901760
    %1294 = vmatmul.mubr.f32.gmra.mxu0 %v1293
    %v1295 = vpop.f32.mrf.mxu0
    %v1296 = vadd.f32 %v1177, %v1295
    %v1297 = vpop.f32.mrf.mxu0
    %1298 = vdwg.mxu0
    %1299 = vmatprep.subr.mxu0 0.0
    %v1300 = vand.u32 %v744, 4294901760
    %1301 = vmatpush1.msra.mxu0 %v1300
    %1302 = vmatprep.subr.mxu0 0.0
    %v1303 = vand.u32 %v743, 4294901760
    %1304 = vmatpush1.msra.mxu0 %v1303
    %1305 = vmatprep.subr.mxu0 0.0
    %v1306 = vand.u32 %v742, 4294901760
    %1307 = vmatpush1.msra.mxu0 %v1306
    %1308 = vmatprep.subr.mxu0 0.0
    %v1309 = vand.u32 %v741, 4294901760
    %1310 = vmatpush1.msra.mxu0 %v1309
    %1311 = vmatprep.subr.mxu0 0.0
    %v1312 = vand.u32 %v740, 4294901760
    %1313 = vmatpush1.msra.mxu0 %v1312
    %1314 = vmatprep.subr.mxu0 0.0
    %v1315 = vand.u32 %v739, 4294901760
    %1316 = vmatpush1.msra.mxu0 %v1315
    %1317 = vmatprep.subr.mxu0 0.0
    %v1318 = vand.u32 %v738, 4294901760
    %1319 = vmatpush1.msra.mxu0 %v1318
    %1320 = vmatprep.subr.mxu0 0.0
    %v1321 = vand.u32 %v737, 4294901760
    %1322 = vmatpush1.msra.mxu0 %v1321
    %1323 = vmatprep.subr.mxu0 0.0
    %v1324 = vand.u32 %v736, 4294901760
    %1325 = vmatpush1.msra.mxu0 %v1324
    %1326 = vmatprep.subr.mxu0 0.0
    %v1327 = vand.u32 %v735, 4294901760
    %1328 = vmatpush1.msra.mxu0 %v1327
    %1329 = vmatprep.subr.mxu0 0.0
    %v1330 = vand.u32 %v734, 4294901760
    %1331 = vmatpush1.msra.mxu0 %v1330
    %1332 = vmatprep.subr.mxu0 0.0
    %v1333 = vand.u32 %v733, 4294901760
    %1334 = vmatpush1.msra.mxu0 %v1333
    %1335 = vmatprep.subr.mxu0 0.0
    %v1336 = vand.u32 %v732, 4294901760
    %1337 = vmatpush1.msra.mxu0 %v1336
    %1338 = vmatprep.subr.mxu0 0.0
    %v1339 = vand.u32 %v731, 4294901760
    %1340 = vmatpush1.msra.mxu0 %v1339
    %1341 = vmatprep.subr.mxu0 0.0
    %v1342 = vand.u32 %v730, 4294901760
    %1343 = vmatpush1.msra.mxu0 %v1342
    %1344 = vmatprep.subr.mxu0 0.0
    %v1345 = vand.u32 %v729, 4294901760
    %1346 = vmatpush1.msra.mxu0 %v1345
    %1347 = vmatprep.subr.mxu0 0.0
    %1348 = vmatpush2.msra.mxu0 0.0
    %1349 = vmatprep.subr.mxu0 0.0
    %1350 = vmatpush2.msra.mxu0 0.0
    %1351 = vmatprep.subr.mxu0 0.0
    %1352 = vmatpush2.msra.mxu0 0.0
    %1353 = vmatprep.subr.mxu0 0.0
    %1354 = vmatpush2.msra.mxu0 0.0
    %1355 = vmatprep.subr.mxu0 0.0
    %1356 = vmatpush2.msra.mxu0 0.0
    %1357 = vmatprep.subr.mxu0 0.0
    %1358 = vmatpush2.msra.mxu0 0.0
    %1359 = vmatprep.subr.mxu0 0.0
    %1360 = vmatpush2.msra.mxu0 0.0
    %1361 = vmatprep.subr.mxu0 0.0
    %1362 = vmatpush2.msra.mxu0 0.0
    %1363 = vmatprep.subr.mxu0 0.0
    %1364 = vmatpush2.msra.mxu0 0.0
    %1365 = vmatprep.subr.mxu0 0.0
    %1366 = vmatpush2.msra.mxu0 0.0
    %1367 = vmatprep.subr.mxu0 0.0
    %1368 = vmatpush2.msra.mxu0 0.0
    %1369 = vmatprep.subr.mxu0 0.0
    %1370 = vmatpush2.msra.mxu0 0.0
    %1371 = vmatprep.subr.mxu0 0.0
    %1372 = vmatpush2.msra.mxu0 0.0
    %1373 = vmatprep.subr.mxu0 0.0
    %1374 = vmatpush2.msra.mxu0 0.0
    %1375 = vmatprep.subr.mxu0 0.0
    %1376 = vmatpush2.msra.mxu0 0.0
    %1377 = vmatprep.subr.mxu0 0.0
    %1378 = vmatpush2.msra.mxu0 0.0
    %1379 = vmatprep.mubr.f32.mxu0 0.0
    %v1380 = vand.u32 %v726, 4294901760
    %1381 = vmatmul.mubr.f32.gmra.mxu0 %v1380
    %v1382 = vpop.f32.mrf.mxu0
    %v1383 = vadd.f32 %v1296, %v1382
    %v1384 = vpop.f32.mrf.mxu0
    %1385 = vdwg.mxu0
    %v1386 = vadd.f32 %v70, %v1383
    %1387 = vst [vmem:[#allocation10] sm:$0xff] %v1386
    // Predicated region
    $region34: #{tpu_custom_call.1} parent=1 // pred_check
      _
    $region35: #{tpu_custom_call.1} parent=1 // pred_check_branch
      %1389 = sbr.rel (0) target = $region37
    $region36: #{tpu_custom_call.1} parent=1 // pred_region
      %s1391 = ssub.s32 128, 128
      %1392 = vsyncadd [#allocation4], %s1391
      %s1394 = sshll.u32 [#allocation10], 4
      %s1395 = int_to_ptr.vmem [resolvable:$true] %s1394
      %1397 = dma.vmem_to_hbm [thread:$0]  %s1395, 128, %s4, [#allocation4]
    $region37: #{tpu_custom_call.1} parent=1 // pred_fallthru
      _
    // Predicated region
    $region38: #{tpu_custom_call.1} parent=1 // pred_check
      _
    $region39: #{tpu_custom_call.1} parent=1 // pred_check_branch
      %1399 = sbr.rel (0) target = $region41
    $region40: #{tpu_custom_call.1} parent=1 // pred_region
      %1400 = dma.done [#allocation4], 128
    $region41: #{tpu_custom_call.1} parent=1 // pred_fallthru
      _
    %1401 = vsyncpa [#allocation3], 1
    %1402 = vsyncpa [#allocation6], 1
    %1403 = vsyncpa [#allocation9], 1
    %1404 = vsyncpa [#allocation4], 1

</llo_original>
